<compile_context>
chip_gen: v7x
topology: tpu7x:2x2x1
jax: 0.10.0
libtpu: 0.0.40
codegen_flags: <defaults>
</compile_context>

<pallas_src>
import jax
import jax.numpy as jnp
from jax.experimental import pallas as pl
from jax.experimental.pallas import tpu as pltpu


LEAKY_ALPHA = 0.05      # matches GATLayer default alpha=0.05 in the reference
NEG_BIG = -1e30         # finite "-inf": exp underflows to exactly 0, no inf*0 NaN
CLS_PAD = 128           # lane-dense output slab width


def _gat_dense(h_in, adj_mask, w, a_src_row, a_dst_row, *, need_alpha):
    """One GAT layer on dense VMEM tiles.

    a_src_row / a_dst_row are (1, H): attention scores are VPU elementwise-mul
    + lane reductions, not MXU matvecs with lane-width-1 outputs.
    """
    z = jnp.dot(h_in, w, preferred_element_type=jnp.float32)          # (N, H) MXU
    s_src = jnp.sum(z * a_src_row, axis=-1, keepdims=True)            # (N, 1) VPU/XLU
    s_dst = jnp.sum(z * a_dst_row, axis=-1, keepdims=True)            # (N, 1)
    e = s_src + s_dst.T                                               # (N, N)
    e = jnp.where(e > 0, e, LEAKY_ALPHA * e)                          # LeakyReLU(0.05)
    e = jnp.where(adj_mask, e, NEG_BIG)                               # mask BEFORE exp
    # per-row max subtraction (softmax-invariant, overflow-proof); clamp at 0
    # so rows with no edges stay finite.
    m = jnp.maximum(jnp.max(e, axis=1, keepdims=True), 0.0)
    h = jnp.exp(e - m)                                                # 0 at non-edges
    denom = jnp.sum(h, axis=1, keepdims=True)
    denom = jnp.where(denom == 0.0, 1.0, denom)                       # isolated nodes
    # exact reciprocal: denom is only (N, 1), so this is negligible cost and
    # keeps per-row attention sums at 1.0 to float32 rounding (the approx EUP
    # reciprocal previously caused ~3e-3 relative error and failed validation).
    inv = 1.0 / denom
    if need_alpha:
        alpha = h * inv                                               # (N, N)
        out = jnp.dot(alpha, z, preferred_element_type=jnp.float32)   # (N, H)
        return out, alpha
    # fuse the normalization into the (N,H) matmul output: saves an (N,N) mul
    out = jnp.dot(h, z, preferred_element_type=jnp.float32) * inv
    return out, None


def gnn_kernel(x_ref, adj_ref, w1_ref, a1s_ref, a1d_ref,
               w2_ref, a2s_ref, a2d_ref, wfc_ref, bfc_ref,
               logp_ref, alpha_ref):
    x = x_ref[...]
    adj_mask = adj_ref[...] > 0.0

    # ---- GAT layer 1 + ReLU (dropout = identity in eval mode) ----
    z1, _ = _gat_dense(x, adj_mask, w1_ref[...], a1s_ref[...], a1d_ref[...],
                       need_alpha=False)
    z1 = jnp.maximum(z1, 0.0)

    # ---- GAT layer 2 + ReLU (its alpha is returned, per the reference) ----
    z2, alpha2 = _gat_dense(z1, adj_mask, w2_ref[...], a2s_ref[...], a2d_ref[...],
                            need_alpha=True)
    z2 = jnp.maximum(z2, 0.0)

    # ---- final linear (lane-dense padded to 128 classes) + log_softmax ----
    # padded bias columns are -1e9 so they contribute exp(..)=0 to the lse and
    # never win the max; real columns get the exact log-softmax values.
    logits = jnp.dot(z2, wfc_ref[...], preferred_element_type=jnp.float32) + bfc_ref[...]
    m = jnp.max(logits, axis=1, keepdims=True)
    lse = jnp.log(jnp.sum(jnp.exp(logits - m), axis=1, keepdims=True)) + m
    logp_ref[...] = logits - lse
    alpha_ref[...] = alpha2


def gnn_forward(x, adj, params):
    """Wrapper: pads the classifier to a lane-dense 128-wide slab, calls the
    fused Pallas kernel, and slices back.  Returns (log_probs, alpha_dense)."""
    n, _ = x.shape
    nhid, nclass = params["wfc"].shape

    wfc_p = jnp.zeros((nhid, CLS_PAD), jnp.float32).at[:, :nclass].set(params["wfc"])
    bfc_p = jnp.full((1, CLS_PAD), -1e9, jnp.float32).at[:, :nclass].set(params["bfc"])

    vmem_spec = pl.BlockSpec(memory_space=pltpu.MemorySpace.VMEM)
    logp_pad, alpha = pl.pallas_call(
        gnn_kernel,
        out_shape=(
            jax.ShapeDtypeStruct((n, CLS_PAD), jnp.float32),  # padded log_softmax slab
            jax.ShapeDtypeStruct((n, n), jnp.float32),        # dense attention of layer 2
        ),
        in_specs=[vmem_spec] * 10,
        out_specs=(vmem_spec, vmem_spec),
        compiler_params=pltpu.CompilerParams(vmem_limit_bytes=64 * 1024 * 1024),
    )(
        x, adj,
        params["w1"], params["a1_src"], params["a1_dst"],
        params["w2"], params["a2_src"], params["a2_dst"],
        wfc_p, bfc_p,
    )
    return logp_pad[:, :nclass], alpha


def init_params(key, nfeat, nhid, nclass):
    """Deterministic parameter init mirroring the PyTorch module's shapes.

    PyTorch Linear(n_in, n_out) stores weight (n_out, n_in); we pre-transpose
    so the kernel does plain `x @ W`.  The (1, 2*nhid) attention weight `a` is
    split into row vectors a_src = a[:, :nhid] and a_dst = a[:, nhid:] which
    the kernel applies via VPU row-dots (no matvec).
    """
    ks = jax.random.split(key, 5)
    scale = 0.1
    w1 = scale * jax.random.normal(ks[0], (nfeat, nhid), jnp.float32)
    a1 = scale * jax.random.normal(ks[1], (1, 2 * nhid), jnp.float32)
    w2 = scale * jax.random.normal(ks[2], (nhid, nhid), jnp.float32)
    a2 = scale * jax.random.normal(ks[3], (1, 2 * nhid), jnp.float32)
    wfc = scale * jax.random.normal(ks[4], (nhid, nclass), jnp.float32)
    bfc = jnp.zeros((1, nclass), jnp.float32)
    return {
        "w1": w1,
        "a1_src": a1[:, :nhid],   # (1, nhid)
        "a1_dst": a1[:, nhid:],   # (1, nhid)
        "w2": w2,
        "a2_src": a2[:, :nhid],
        "a2_dst": a2[:, nhid:],
        "wfc": wfc,
        "bfc": bfc,
    }


if __name__ == "__main__":
    N, NFEAT, NHID, NCLASS = 64, 32, 32, 8

    key = jax.random.PRNGKey(0)
    k_x, k_adj, k_par = jax.random.split(key, 3)

    # node features
    x = jax.random.normal(k_x, (N, NFEAT), jnp.float32)

    # random sparse-ish symmetric adjacency with self-loops, as a dense 0/1 mask
    rand = jax.random.uniform(k_adj, (N, N))
    adj = (rand < 0.08).astype(jnp.float32)
    adj = jnp.maximum(adj, adj.T)
    adj = jnp.maximum(adj, jnp.eye(N, dtype=jnp.float32))

    params = init_params(k_par, NFEAT, NHID, NCLASS)

    log_probs, alpha_dense = gnn_forward(x, adj, params)
    jax.block_until_ready((log_probs, alpha_dense))

    # Glue: recover the per-edge alpha vector exactly as PyTorch returns it
    # (one value per nonzero of the coalesced sparse adjacency, row-major order).
    import numpy as np
    adj_np = np.asarray(adj)
    rows, cols = np.nonzero(adj_np)
    alpha_edges = np.asarray(alpha_dense)[rows, cols]   # shape (num_edges,)

    assert log_probs.shape == (N, NCLASS)
    assert alpha_edges.shape == (rows.shape[0],)
    assert np.all(np.isfinite(np.asarray(log_probs)))
    # each row of log_probs should be a valid log-distribution
    np.testing.assert_allclose(np.exp(np.asarray(log_probs)).sum(axis=1), 1.0, rtol=1e-5)
    # non-edges carry exactly zero attention
    assert np.all(np.asarray(alpha_dense)[adj_np == 0.0] == 0.0)
    # per-source-node attention sums to 1 (exact reciprocal -> float32 rounding only)
    sums = np.zeros(N)
    np.add.at(sums, rows, alpha_edges)
    np.testing.assert_allclose(sums, 1.0, rtol=1e-4)

    print("KERNEL_OK")
</pallas_src>

<mosaic_0001>
module attributes {stable_mosaic.version = 11 : i64} {
  func.func @gnn_kernel(%arg0: memref<64x32xf32, #tpu.memory_space<vmem>>, %arg1: memref<64x64xf32, #tpu.memory_space<vmem>>, %arg2: memref<32x32xf32, #tpu.memory_space<vmem>>, %arg3: memref<1x32xf32, #tpu.memory_space<vmem>>, %arg4: memref<1x32xf32, #tpu.memory_space<vmem>>, %arg5: memref<32x32xf32, #tpu.memory_space<vmem>>, %arg6: memref<1x32xf32, #tpu.memory_space<vmem>>, %arg7: memref<1x32xf32, #tpu.memory_space<vmem>>, %arg8: memref<32x128xf32, #tpu.memory_space<vmem>>, %arg9: memref<1x128xf32, #tpu.memory_space<vmem>>, %arg10: memref<64x128xf32, #tpu.memory_space<vmem>>, %arg11: memref<64x64xf32, #tpu.memory_space<vmem>>) attributes {dimension_semantics = [], scalar_prefetch = 0 : i64, scratch_operands = 0 : i64, tpu.core_type = #tpu.core_type<tc>} {
    %c0 = arith.constant 0 : index
    %c0_0 = arith.constant 0 : index
    %0 = vector.load %arg0[%c0, %c0_0] : memref<64x32xf32, #tpu.memory_space<vmem>>, vector<64x32xf32>
    %c0_1 = arith.constant 0 : index
    %c0_2 = arith.constant 0 : index
    %1 = vector.load %arg1[%c0_1, %c0_2] : memref<64x64xf32, #tpu.memory_space<vmem>>, vector<64x64xf32>
    %cst = arith.constant 0.000000e+00 : f32
    %2 = vector.broadcast %cst : f32 to vector<64x64xf32>
    %3 = arith.cmpf ogt, %1, %2 : vector<64x64xf32>
    %c0_3 = arith.constant 0 : index
    %c0_4 = arith.constant 0 : index
    %4 = vector.load %arg2[%c0_3, %c0_4] : memref<32x32xf32, #tpu.memory_space<vmem>>, vector<32x32xf32>
    %c0_5 = arith.constant 0 : index
    %c0_6 = arith.constant 0 : index
    %5 = vector.load %arg3[%c0_5, %c0_6] : memref<1x32xf32, #tpu.memory_space<vmem>>, vector<1x32xf32>
    %c0_7 = arith.constant 0 : index
    %c0_8 = arith.constant 0 : index
    %6 = vector.load %arg4[%c0_7, %c0_8] : memref<1x32xf32, #tpu.memory_space<vmem>>, vector<1x32xf32>
    %cst_9 = arith.constant dense<0.000000e+00> : vector<64x32xf32>
    %7 = tpu.matmul %0, %4, %cst_9 {dimension_numbers = #tpu.dot_dimension_numbers<[1], [0], [0], [1], [0, 0, 1, 1], [], []>} : vector<64x32xf32>, vector<32x32xf32>, vector<64x32xf32> -> vector<64x32xf32>
    %8 = vector.broadcast %5 : vector<1x32xf32> to vector<64x32xf32>
    %9 = arith.mulf %7, %8 : vector<64x32xf32>
    %cst_10 = arith.constant dense<0.000000e+00> : vector<64xf32>
    %10 = vector.multi_reduction <add>, %9, %cst_10 [1] : vector<64x32xf32> to vector<64xf32>
    %11 = vector.shape_cast %10 : vector<64xf32> to vector<64x1xf32>
    %12 = vector.broadcast %6 : vector<1x32xf32> to vector<64x32xf32>
    %13 = arith.mulf %7, %12 : vector<64x32xf32>
    %cst_11 = arith.constant dense<0.000000e+00> : vector<64xf32>
    %14 = vector.multi_reduction <add>, %13, %cst_11 [1] : vector<64x32xf32> to vector<64xf32>
    %15 = vector.shape_cast %14 : vector<64xf32> to vector<64x1xf32>
    %16 = tpu.transpose %15, [1, 0] : vector<64x1xf32> -> vector<1x64xf32>
    %17 = vector.broadcast %11 : vector<64x1xf32> to vector<64x64xf32>
    %18 = vector.broadcast %16 : vector<1x64xf32> to vector<64x64xf32>
    %19 = arith.addf %17, %18 : vector<64x64xf32>
    %cst_12 = arith.constant 0.000000e+00 : f32
    %20 = vector.broadcast %cst_12 : f32 to vector<64x64xf32>
    %21 = arith.cmpf ogt, %19, %20 : vector<64x64xf32>
    %cst_13 = arith.constant 5.000000e-02 : f32
    %22 = vector.broadcast %cst_13 : f32 to vector<64x64xf32>
    %23 = arith.mulf %22, %19 : vector<64x64xf32>
    %24 = arith.select %21, %19, %23 : vector<64x64xi1>, vector<64x64xf32>
    %cst_14 = arith.constant -1.000000e+30 : f32
    %25 = vector.broadcast %cst_14 : f32 to vector<64x64xf32>
    %26 = arith.select %3, %24, %25 : vector<64x64xi1>, vector<64x64xf32>
    %cst_15 = arith.constant dense<0xFF800000> : vector<64xf32>
    %27 = vector.multi_reduction <maximumf>, %26, %cst_15 [1] : vector<64x64xf32> to vector<64xf32>
    %28 = vector.shape_cast %27 : vector<64xf32> to vector<64x1xf32>
    %cst_16 = arith.constant 0.000000e+00 : f32
    %29 = vector.broadcast %cst_16 : f32 to vector<64x1xf32>
    %30 = arith.maximumf %28, %29 : vector<64x1xf32>
    %31 = vector.broadcast %30 : vector<64x1xf32> to vector<64x64xf32>
    %32 = arith.subf %26, %31 : vector<64x64xf32>
    %33 = math.exp %32 : vector<64x64xf32>
    %cst_17 = arith.constant dense<0.000000e+00> : vector<64xf32>
    %34 = vector.multi_reduction <add>, %33, %cst_17 [1] : vector<64x64xf32> to vector<64xf32>
    %35 = vector.shape_cast %34 : vector<64xf32> to vector<64x1xf32>
    %cst_18 = arith.constant 0.000000e+00 : f32
    %36 = vector.broadcast %cst_18 : f32 to vector<64x1xf32>
    %37 = arith.cmpf oeq, %35, %36 : vector<64x1xf32>
    %cst_19 = arith.constant 1.000000e+00 : f32
    %38 = vector.broadcast %cst_19 : f32 to vector<64x1xf32>
    %39 = arith.select %37, %38, %35 : vector<64x1xi1>, vector<64x1xf32>
    %cst_20 = arith.constant 1.000000e+00 : f32
    %40 = vector.broadcast %cst_20 : f32 to vector<64x1xf32>
    %41 = arith.divf %40, %39 : vector<64x1xf32>
    %cst_21 = arith.constant dense<0.000000e+00> : vector<64x32xf32>
    %42 = tpu.matmul %33, %7, %cst_21 {dimension_numbers = #tpu.dot_dimension_numbers<[1], [0], [0], [1], [0, 0, 1, 1], [], []>} : vector<64x64xf32>, vector<64x32xf32>, vector<64x32xf32> -> vector<64x32xf32>
    %43 = vector.broadcast %41 : vector<64x1xf32> to vector<64x32xf32>
    %44 = arith.mulf %42, %43 : vector<64x32xf32>
    %cst_22 = arith.constant 0.000000e+00 : f32
    %45 = vector.broadcast %cst_22 : f32 to vector<64x32xf32>
    %46 = arith.maximumf %44, %45 : vector<64x32xf32>
    %c0_23 = arith.constant 0 : index
    %c0_24 = arith.constant 0 : index
    %47 = vector.load %arg5[%c0_23, %c0_24] : memref<32x32xf32, #tpu.memory_space<vmem>>, vector<32x32xf32>
    %c0_25 = arith.constant 0 : index
    %c0_26 = arith.constant 0 : index
    %48 = vector.load %arg6[%c0_25, %c0_26] : memref<1x32xf32, #tpu.memory_space<vmem>>, vector<1x32xf32>
    %c0_27 = arith.constant 0 : index
    %c0_28 = arith.constant 0 : index
    %49 = vector.load %arg7[%c0_27, %c0_28] : memref<1x32xf32, #tpu.memory_space<vmem>>, vector<1x32xf32>
    %cst_29 = arith.constant dense<0.000000e+00> : vector<64x32xf32>
    %50 = tpu.matmul %46, %47, %cst_29 {dimension_numbers = #tpu.dot_dimension_numbers<[1], [0], [0], [1], [0, 0, 1, 1], [], []>} : vector<64x32xf32>, vector<32x32xf32>, vector<64x32xf32> -> vector<64x32xf32>
    %51 = vector.broadcast %48 : vector<1x32xf32> to vector<64x32xf32>
    %52 = arith.mulf %50, %51 : vector<64x32xf32>
    %cst_30 = arith.constant dense<0.000000e+00> : vector<64xf32>
    %53 = vector.multi_reduction <add>, %52, %cst_30 [1] : vector<64x32xf32> to vector<64xf32>
    %54 = vector.shape_cast %53 : vector<64xf32> to vector<64x1xf32>
    %55 = vector.broadcast %49 : vector<1x32xf32> to vector<64x32xf32>
    %56 = arith.mulf %50, %55 : vector<64x32xf32>
    %cst_31 = arith.constant dense<0.000000e+00> : vector<64xf32>
    %57 = vector.multi_reduction <add>, %56, %cst_31 [1] : vector<64x32xf32> to vector<64xf32>
    %58 = vector.shape_cast %57 : vector<64xf32> to vector<64x1xf32>
    %59 = tpu.transpose %58, [1, 0] : vector<64x1xf32> -> vector<1x64xf32>
    %60 = vector.broadcast %54 : vector<64x1xf32> to vector<64x64xf32>
    %61 = vector.broadcast %59 : vector<1x64xf32> to vector<64x64xf32>
    %62 = arith.addf %60, %61 : vector<64x64xf32>
    %cst_32 = arith.constant 0.000000e+00 : f32
    %63 = vector.broadcast %cst_32 : f32 to vector<64x64xf32>
    %64 = arith.cmpf ogt, %62, %63 : vector<64x64xf32>
    %cst_33 = arith.constant 5.000000e-02 : f32
    %65 = vector.broadcast %cst_33 : f32 to vector<64x64xf32>
    %66 = arith.mulf %65, %62 : vector<64x64xf32>
    %67 = arith.select %64, %62, %66 : vector<64x64xi1>, vector<64x64xf32>
    %cst_34 = arith.constant -1.000000e+30 : f32
    %68 = vector.broadcast %cst_34 : f32 to vector<64x64xf32>
    %69 = arith.select %3, %67, %68 : vector<64x64xi1>, vector<64x64xf32>
    %cst_35 = arith.constant dense<0xFF800000> : vector<64xf32>
    %70 = vector.multi_reduction <maximumf>, %69, %cst_35 [1] : vector<64x64xf32> to vector<64xf32>
    %71 = vector.shape_cast %70 : vector<64xf32> to vector<64x1xf32>
    %cst_36 = arith.constant 0.000000e+00 : f32
    %72 = vector.broadcast %cst_36 : f32 to vector<64x1xf32>
    %73 = arith.maximumf %71, %72 : vector<64x1xf32>
    %74 = vector.broadcast %73 : vector<64x1xf32> to vector<64x64xf32>
    %75 = arith.subf %69, %74 : vector<64x64xf32>
    %76 = math.exp %75 : vector<64x64xf32>
    %cst_37 = arith.constant dense<0.000000e+00> : vector<64xf32>
    %77 = vector.multi_reduction <add>, %76, %cst_37 [1] : vector<64x64xf32> to vector<64xf32>
    %78 = vector.shape_cast %77 : vector<64xf32> to vector<64x1xf32>
    %cst_38 = arith.constant 0.000000e+00 : f32
    %79 = vector.broadcast %cst_38 : f32 to vector<64x1xf32>
    %80 = arith.cmpf oeq, %78, %79 : vector<64x1xf32>
    %cst_39 = arith.constant 1.000000e+00 : f32
    %81 = vector.broadcast %cst_39 : f32 to vector<64x1xf32>
    %82 = arith.select %80, %81, %78 : vector<64x1xi1>, vector<64x1xf32>
    %cst_40 = arith.constant 1.000000e+00 : f32
    %83 = vector.broadcast %cst_40 : f32 to vector<64x1xf32>
    %84 = arith.divf %83, %82 : vector<64x1xf32>
    %85 = vector.broadcast %84 : vector<64x1xf32> to vector<64x64xf32>
    %86 = arith.mulf %76, %85 : vector<64x64xf32>
    %cst_41 = arith.constant dense<0.000000e+00> : vector<64x32xf32>
    %87 = tpu.matmul %86, %50, %cst_41 {dimension_numbers = #tpu.dot_dimension_numbers<[1], [0], [0], [1], [0, 0, 1, 1], [], []>} : vector<64x64xf32>, vector<64x32xf32>, vector<64x32xf32> -> vector<64x32xf32>
    %cst_42 = arith.constant 0.000000e+00 : f32
    %88 = vector.broadcast %cst_42 : f32 to vector<64x32xf32>
    %89 = arith.maximumf %87, %88 : vector<64x32xf32>
    %c0_43 = arith.constant 0 : index
    %c0_44 = arith.constant 0 : index
    %90 = vector.load %arg8[%c0_43, %c0_44] : memref<32x128xf32, #tpu.memory_space<vmem>>, vector<32x128xf32>
    %cst_45 = arith.constant dense<0.000000e+00> : vector<64x128xf32>
    %91 = tpu.matmul %89, %90, %cst_45 {dimension_numbers = #tpu.dot_dimension_numbers<[1], [0], [0], [1], [0, 0, 1, 1], [], []>} : vector<64x32xf32>, vector<32x128xf32>, vector<64x128xf32> -> vector<64x128xf32>
    %c0_46 = arith.constant 0 : index
    %c0_47 = arith.constant 0 : index
    %92 = vector.load %arg9[%c0_46, %c0_47] : memref<1x128xf32, #tpu.memory_space<vmem>>, vector<1x128xf32>
    %93 = vector.broadcast %92 : vector<1x128xf32> to vector<64x128xf32>
    %94 = arith.addf %91, %93 : vector<64x128xf32>
    %cst_48 = arith.constant dense<0xFF800000> : vector<64xf32>
    %95 = vector.multi_reduction <maximumf>, %94, %cst_48 [1] : vector<64x128xf32> to vector<64xf32>
    %96 = vector.shape_cast %95 : vector<64xf32> to vector<64x1xf32>
    %97 = vector.broadcast %96 : vector<64x1xf32> to vector<64x128xf32>
    %98 = arith.subf %94, %97 : vector<64x128xf32>
    %99 = math.exp %98 : vector<64x128xf32>
    %cst_49 = arith.constant dense<0.000000e+00> : vector<64xf32>
    %100 = vector.multi_reduction <add>, %99, %cst_49 [1] : vector<64x128xf32> to vector<64xf32>
    %101 = vector.shape_cast %100 : vector<64xf32> to vector<64x1xf32>
    %102 = math.log %101 : vector<64x1xf32>
    %103 = arith.addf %102, %96 : vector<64x1xf32>
    %104 = vector.broadcast %103 : vector<64x1xf32> to vector<64x128xf32>
    %105 = arith.subf %94, %104 : vector<64x128xf32>
    %c0_50 = arith.constant 0 : index
    %c0_51 = arith.constant 0 : index
    %106 = vector.load %arg10[%c0_50, %c0_51] : memref<64x128xf32, #tpu.memory_space<vmem>>, vector<64x128xf32>
    tpu.vector_store %arg10[%c0_50, %c0_51], %105 {strides = array<i32>} : memref<64x128xf32, #tpu.memory_space<vmem>>, vector<64x128xf32>,
    %c0_52 = arith.constant 0 : index
    %c0_53 = arith.constant 0 : index
    %107 = vector.load %arg11[%c0_52, %c0_53] : memref<64x64xf32, #tpu.memory_space<vmem>>, vector<64x64xf32>
    tpu.vector_store %arg11[%c0_52, %c0_53], %86 {strides = array<i32>} : memref<64x64xf32, #tpu.memory_space<vmem>>, vector<64x64xf32>,
    return
  }
}

</mosaic_0001>

<llo_original>
// kernel: tpu_custom_call.1
$region0: #{tpu_custom_call.1}
  #allocation0 [shape = 'u32[]', space=smem, size = 0x4, offset = 0x4, fixed_abs, tag = 'smem constant byte address 0x4 - core index']
  #allocation1 [shape = 'u32[144,128]{1,0:T(1,128)}', space=vmem, size = 0x12000, scoped, tag = 'internal scratch']
  %s0 = inlined_call_operand.hbm [shape: f32[64,32], index: 0, kind: input, shape index: {}]
  %s1 = inlined_call_operand.hbm [shape: f32[64,64], index: 1, kind: input, shape index: {}]
  %s2 = inlined_call_operand.hbm [shape: f32[32,32], index: 2, kind: input, shape index: {}]
  %s3 = inlined_call_operand.hbm [shape: f32[1,32], index: 3, kind: input, shape index: {}]
  %s4 = inlined_call_operand.hbm [shape: f32[1,32], index: 4, kind: input, shape index: {}]
  %s5 = inlined_call_operand.hbm [shape: f32[32,32], index: 5, kind: input, shape index: {}]
  %s6 = inlined_call_operand.hbm [shape: f32[1,32], index: 6, kind: input, shape index: {}]
  %s7 = inlined_call_operand.hbm [shape: f32[1,32], index: 7, kind: input, shape index: {}]
  %s8 = inlined_call_operand.hbm [shape: f32[32,128], index: 8, kind: input, shape index: {}]
  %s9 = inlined_call_operand.hbm [shape: f32[1,128], index: 9, kind: input, shape index: {}]
  %s10 = inlined_call_operand.hbm [shape: f32[64,128], index: 10, kind: output, shape index: {0}]
  %s11 = inlined_call_operand.hbm [shape: f32[64,64], index: 11, kind: output, shape index: {1}]
  %12 = xla_tuple %s10, %s11
  %s13 = sld [smem:[#allocation0]]
  $region98: #{tpu_custom_call.1} parent=0
    _
  %s15 = ssub.s32 1, %s13
  %s16 = scalar_select 0, %s15, %s13
  $region1: #{tpu_custom_call.1} parent=0
    #allocation2 [shape = 'u8[32768]{0}', space=vmem, size = 0x8000, scoped, tag = 'input window, operand 0, single buffered']
    #allocation3 [shape = 's32[1]{0}', space=sflag, size = 0x4, scoped, tag = 'scoped memory for tpu_custom_call.1']
    #allocation4 [shape = 's32[1]{0}', space=sflag, size = 0x4, scoped, tag = 'scoped memory for tpu_custom_call.1']
    #allocation5 [shape = 'u8[32768]{0}', space=vmem, size = 0x8000, scoped, tag = 'input window, operand 1, single buffered']
    #allocation6 [shape = 's32[1]{0}', space=sflag, size = 0x4, scoped, tag = 'scoped memory for tpu_custom_call.1']
    #allocation7 [shape = 'u8[16384]{0}', space=vmem, size = 0x4000, scoped, tag = 'input window, operand 2, single buffered']
    #allocation8 [shape = 'u8[512]{0}', space=vmem, size = 0x400, scoped, tag = 'input window, operand 3, single buffered']
    #allocation9 [shape = 's32[1]{0}', space=sflag, size = 0x4, scoped, tag = 'scoped memory for tpu_custom_call.1']
    #allocation10 [shape = 'u8[512]{0}', space=vmem, size = 0x400, scoped, tag = 'input window, operand 4, single buffered']
    #allocation11 [shape = 'u8[16384]{0}', space=vmem, size = 0x4000, scoped, tag = 'input window, operand 5, single buffered']
    #allocation12 [shape = 's32[1]{0}', space=sflag, size = 0x4, scoped, tag = 'scoped memory for tpu_custom_call.1']
    #allocation13 [shape = 'u8[512]{0}', space=vmem, size = 0x400, scoped, tag = 'input window, operand 6, single buffered']
    #allocation14 [shape = 'u8[512]{0}', space=vmem, size = 0x400, scoped, tag = 'input window, operand 7, single buffered']
    #allocation15 [shape = 's32[1]{0}', space=sflag, size = 0x4, scoped, tag = 'scoped memory for tpu_custom_call.1']
    #allocation16 [shape = 'u8[16384]{0}', space=vmem, size = 0x4000, scoped, tag = 'input window, operand 8, single buffered']
    #allocation17 [shape = 'u8[512]{0}', space=vmem, size = 0x400, scoped, tag = 'input window, operand 9, single buffered']
    #allocation18 [shape = 's32[1]{0}', space=sflag, size = 0x4, scoped, tag = 'scoped memory for tpu_custom_call.1']
    #allocation19 [shape = 'u8[32768]{0}', space=vmem, size = 0x8000, scoped, tag = 'output window, operand 0, single buffered']
    #allocation20 [shape = 'u8[32768]{0}', space=vmem, size = 0x8000, scoped, tag = 'output window, operand 1, single buffered']
    #allocation21 [shape = 's32[1]{0}', space=sflag, size = 0x4, scoped, tag = 'scoped memory for tpu_custom_call.1']
    %17 = vsyncpa [#allocation3], 0
    %18 = vsyncpa [#allocation6], 0
    %19 = vsyncpa [#allocation9], 0
    %20 = vsyncpa [#allocation12], 0
    %21 = vsyncpa [#allocation15], 0
    %22 = vsyncpa [#allocation18], 0
    %23 = vsyncpa [#allocation4], 0
    %24 = vsyncpa [#allocation21], 0
    // Predicated region
    $region2: #{tpu_custom_call.1} parent=1 // pred_check
      _
    $region3: #{tpu_custom_call.1} parent=1 // pred_check_branch
      %26 = sbr.rel (0) target = $region5
    $region4: #{tpu_custom_call.1} parent=1 // pred_region
      %s28 = ssub.s32 1024, 1024
      %29 = vsyncadd [#allocation3], %s28
      %s30 = sshll.u32 [#allocation2], 4
      %s31 = int_to_ptr.vmem [resolvable:$true] %s30
      %36 = dma.hbm_to_vmem [thread:$0]  %s0, 1024, %s31, [#allocation3], 128, 128, 8
    $region5: #{tpu_custom_call.1} parent=1 // pred_fallthru
      _
    // Predicated region
    $region6: #{tpu_custom_call.1} parent=1 // pred_check
      _
    $region7: #{tpu_custom_call.1} parent=1 // pred_check_branch
      %38 = sbr.rel (0) target = $region9
    $region8: #{tpu_custom_call.1} parent=1 // pred_region
      %s40 = ssub.s32 1024, 1024
      %41 = vsyncadd [#allocation6], %s40
      %s42 = sshll.u32 [#allocation5], 4
      %s43 = int_to_ptr.vmem [resolvable:$true] %s42
      %48 = dma.hbm_to_vmem [thread:$0]  %s1, 1024, %s43, [#allocation6], 128, 128, 8
    $region9: #{tpu_custom_call.1} parent=1 // pred_fallthru
      _
    // Predicated region
    $region10: #{tpu_custom_call.1} parent=1 // pred_check
      _
    $region11: #{tpu_custom_call.1} parent=1 // pred_check_branch
      %50 = sbr.rel (0) target = $region13
    $region12: #{tpu_custom_call.1} parent=1 // pred_region
      %s52 = ssub.s32 512, 512
      %53 = vsyncadd [#allocation6], %s52
      %s54 = sshll.u32 [#allocation7], 4
      %s55 = int_to_ptr.vmem [resolvable:$true] %s54
      %60 = dma.hbm_to_vmem [thread:$0]  %s2, 512, %s55, [#allocation6], 128, 128, 8
    $region13: #{tpu_custom_call.1} parent=1 // pred_fallthru
      _
    // Predicated region
    $region14: #{tpu_custom_call.1} parent=1 // pred_check
      _
    $region15: #{tpu_custom_call.1} parent=1 // pred_check_branch
      %62 = sbr.rel (0) target = $region17
    $region16: #{tpu_custom_call.1} parent=1 // pred_region
      %s64 = ssub.s32 16, 16
      %65 = vsyncadd [#allocation9], %s64
      %s67 = sshll.u32 [#allocation8], 4
      %s68 = int_to_ptr.vmem [resolvable:$true] %s67
      %70 = dma.hbm_to_vmem [thread:$0]  %s3, 16, %s68, [#allocation9]
    $region17: #{tpu_custom_call.1} parent=1 // pred_fallthru
      _
    // Predicated region
    $region18: #{tpu_custom_call.1} parent=1 // pred_check
      _
    $region19: #{tpu_custom_call.1} parent=1 // pred_check_branch
      %72 = sbr.rel (0) target = $region21
    $region20: #{tpu_custom_call.1} parent=1 // pred_region
      %s74 = ssub.s32 16, 16
      %75 = vsyncadd [#allocation9], %s74
      %s77 = sshll.u32 [#allocation10], 4
      %s78 = int_to_ptr.vmem [resolvable:$true] %s77
      %80 = dma.hbm_to_vmem [thread:$0]  %s4, 16, %s78, [#allocation9]
    $region21: #{tpu_custom_call.1} parent=1 // pred_fallthru
      _
    // Predicated region
    $region22: #{tpu_custom_call.1} parent=1 // pred_check
      _
    $region23: #{tpu_custom_call.1} parent=1 // pred_check_branch
      %82 = sbr.rel (0) target = $region25
    $region24: #{tpu_custom_call.1} parent=1 // pred_region
      %s84 = ssub.s32 512, 512
      %85 = vsyncadd [#allocation12], %s84
      %s86 = sshll.u32 [#allocation11], 4
      %s87 = int_to_ptr.vmem [resolvable:$true] %s86
      %92 = dma.hbm_to_vmem [thread:$0]  %s5, 512, %s87, [#allocation12], 128, 128, 8
    $region25: #{tpu_custom_call.1} parent=1 // pred_fallthru
      _
    // Predicated region
    $region26: #{tpu_custom_call.1} parent=1 // pred_check
      _
    $region27: #{tpu_custom_call.1} parent=1 // pred_check_branch
      %94 = sbr.rel (0) target = $region29
    $region28: #{tpu_custom_call.1} parent=1 // pred_region
      %s96 = ssub.s32 16, 16
      %97 = vsyncadd [#allocation12], %s96
      %s99 = sshll.u32 [#allocation13], 4
      %s100 = int_to_ptr.vmem [resolvable:$true] %s99
      %102 = dma.hbm_to_vmem [thread:$0]  %s6, 16, %s100, [#allocation12]
    $region29: #{tpu_custom_call.1} parent=1 // pred_fallthru
      _
    // Predicated region
    $region30: #{tpu_custom_call.1} parent=1 // pred_check
      _
    $region31: #{tpu_custom_call.1} parent=1 // pred_check_branch
      %104 = sbr.rel (0) target = $region33
    $region32: #{tpu_custom_call.1} parent=1 // pred_region
      %s106 = ssub.s32 16, 16
      %107 = vsyncadd [#allocation15], %s106
      %s109 = sshll.u32 [#allocation14], 4
      %s110 = int_to_ptr.vmem [resolvable:$true] %s109
      %112 = dma.hbm_to_vmem [thread:$0]  %s7, 16, %s110, [#allocation15]
    $region33: #{tpu_custom_call.1} parent=1 // pred_fallthru
      _
    // Predicated region
    $region34: #{tpu_custom_call.1} parent=1 // pred_check
      _
    $region35: #{tpu_custom_call.1} parent=1 // pred_check_branch
      %114 = sbr.rel (0) target = $region37
    $region36: #{tpu_custom_call.1} parent=1 // pred_region
      %s116 = ssub.s32 512, 512
      %117 = vsyncadd [#allocation15], %s116
      %s118 = sshll.u32 [#allocation16], 4
      %s119 = int_to_ptr.vmem [resolvable:$true] %s118
      %124 = dma.hbm_to_vmem [thread:$0]  %s8, 512, %s119, [#allocation15], 128, 128, 8
    $region37: #{tpu_custom_call.1} parent=1 // pred_fallthru
      _
    // Predicated region
    $region38: #{tpu_custom_call.1} parent=1 // pred_check
      _
    $region39: #{tpu_custom_call.1} parent=1 // pred_check_branch
      %126 = sbr.rel (0) target = $region41
    $region40: #{tpu_custom_call.1} parent=1 // pred_region
      %s128 = ssub.s32 16, 16
      %129 = vsyncadd [#allocation18], %s128
      %s131 = sshll.u32 [#allocation17], 4
      %s132 = int_to_ptr.vmem [resolvable:$true] %s131
      %134 = dma.hbm_to_vmem [thread:$0]  %s9, 16, %s132, [#allocation18]
    $region41: #{tpu_custom_call.1} parent=1 // pred_fallthru
      _
    // Predicated region
    $region42: #{tpu_custom_call.1} parent=1 // pred_check
      _
    $region43: #{tpu_custom_call.1} parent=1 // pred_check_branch
      %136 = sbr.rel (0) target = $region45
    $region44: #{tpu_custom_call.1} parent=1 // pred_region
      %137 = dma.done [#allocation3], 1024
    $region45: #{tpu_custom_call.1} parent=1 // pred_fallthru
      _
    // Predicated region
    $region46: #{tpu_custom_call.1} parent=1 // pred_check
      _
    $region47: #{tpu_custom_call.1} parent=1 // pred_check_branch
      %139 = sbr.rel (0) target = $region49
    $region48: #{tpu_custom_call.1} parent=1 // pred_region
      %140 = dma.done [#allocation6], 1024
    $region49: #{tpu_custom_call.1} parent=1 // pred_fallthru
      _
    // Predicated region
    $region50: #{tpu_custom_call.1} parent=1 // pred_check
      _
    $region51: #{tpu_custom_call.1} parent=1 // pred_check_branch
      %142 = sbr.rel (0) target = $region53
    $region52: #{tpu_custom_call.1} parent=1 // pred_region
      %143 = dma.done [#allocation6], 512
    $region53: #{tpu_custom_call.1} parent=1 // pred_fallthru
      _
    // Predicated region
    $region54: #{tpu_custom_call.1} parent=1 // pred_check
      _
    $region55: #{tpu_custom_call.1} parent=1 // pred_check_branch
      %145 = sbr.rel (0) target = $region57
    $region56: #{tpu_custom_call.1} parent=1 // pred_region
      %146 = dma.done [#allocation9], 16
    $region57: #{tpu_custom_call.1} parent=1 // pred_fallthru
      _
    // Predicated region
    $region58: #{tpu_custom_call.1} parent=1 // pred_check
      _
    $region59: #{tpu_custom_call.1} parent=1 // pred_check_branch
      %148 = sbr.rel (0) target = $region61
    $region60: #{tpu_custom_call.1} parent=1 // pred_region
      %149 = dma.done [#allocation9], 16
    $region61: #{tpu_custom_call.1} parent=1 // pred_fallthru
      _
    // Predicated region
    $region62: #{tpu_custom_call.1} parent=1 // pred_check
      _
    $region63: #{tpu_custom_call.1} parent=1 // pred_check_branch
      %151 = sbr.rel (0) target = $region65
    $region64: #{tpu_custom_call.1} parent=1 // pred_region
      %152 = dma.done [#allocation12], 512
    $region65: #{tpu_custom_call.1} parent=1 // pred_fallthru
      _
    // Predicated region
    $region66: #{tpu_custom_call.1} parent=1 // pred_check
      _
    $region67: #{tpu_custom_call.1} parent=1 // pred_check_branch
      %154 = sbr.rel (0) target = $region69
    $region68: #{tpu_custom_call.1} parent=1 // pred_region
      %155 = dma.done [#allocation12], 16
    $region69: #{tpu_custom_call.1} parent=1 // pred_fallthru
      _
    // Predicated region
    $region70: #{tpu_custom_call.1} parent=1 // pred_check
      _
    $region71: #{tpu_custom_call.1} parent=1 // pred_check_branch
      %157 = sbr.rel (0) target = $region73
    $region72: #{tpu_custom_call.1} parent=1 // pred_region
      %158 = dma.done [#allocation15], 16
    $region73: #{tpu_custom_call.1} parent=1 // pred_fallthru
      _
    // Predicated region
    $region74: #{tpu_custom_call.1} parent=1 // pred_check
      _
    $region75: #{tpu_custom_call.1} parent=1 // pred_check_branch
      %160 = sbr.rel (0) target = $region77
    $region76: #{tpu_custom_call.1} parent=1 // pred_region
      %161 = dma.done [#allocation15], 512
    $region77: #{tpu_custom_call.1} parent=1 // pred_fallthru
      _
    // Predicated region
    $region78: #{tpu_custom_call.1} parent=1 // pred_check
      _
    $region79: #{tpu_custom_call.1} parent=1 // pred_check_branch
      %163 = sbr.rel (0) target = $region81
    $region80: #{tpu_custom_call.1} parent=1 // pred_region
      %164 = dma.done [#allocation18], 16
    $region81: #{tpu_custom_call.1} parent=1 // pred_fallthru
      _
    %v165 = vld [vmem:[#allocation2] sm:$0xff]
    %v166 = vld [vmem:[#allocation2 + $0x8] sm:$0xff]
    %v167 = vld [vmem:[#allocation2 + $0x10] sm:$0xff]
    %v168 = vld [vmem:[#allocation2 + $0x18] sm:$0xff]
    %v169 = vld [vmem:[#allocation2 + $0x20] sm:$0xff]
    %v170 = vld [vmem:[#allocation2 + $0x28] sm:$0xff]
    %v171 = vld [vmem:[#allocation2 + $0x30] sm:$0xff]
    %v172 = vld [vmem:[#allocation2 + $0x38] sm:$0xff]
    %v173 = vld [vmem:[#allocation5] sm:$0xff]
    %v174 = vld [vmem:[#allocation5 + $0x8] sm:$0xff]
    %v175 = vld [vmem:[#allocation5 + $0x10] sm:$0xff]
    %v176 = vld [vmem:[#allocation5 + $0x18] sm:$0xff]
    %v177 = vld [vmem:[#allocation5 + $0x20] sm:$0xff]
    %v178 = vld [vmem:[#allocation5 + $0x28] sm:$0xff]
    %v179 = vld [vmem:[#allocation5 + $0x30] sm:$0xff]
    %v180 = vld [vmem:[#allocation5 + $0x38] sm:$0xff]
    %vm181 = vcmp.gt.f32.partialorder %v173, 0.0
    %vm182 = vcmp.gt.f32.partialorder %v174, 0.0
    %vm183 = vcmp.gt.f32.partialorder %v175, 0.0
    %vm184 = vcmp.gt.f32.partialorder %v176, 0.0
    %vm185 = vcmp.gt.f32.partialorder %v177, 0.0
    %vm186 = vcmp.gt.f32.partialorder %v178, 0.0
    %vm187 = vcmp.gt.f32.partialorder %v179, 0.0
    %vm188 = vcmp.gt.f32.partialorder %v180, 0.0
    %v189 = vld [vmem:[#allocation7] sm:$0xff]
    %v190 = vld [vmem:[#allocation7 + $0x8] sm:$0xff]
    %v191 = vld [vmem:[#allocation7 + $0x10] sm:$0xff]
    %v192 = vld [vmem:[#allocation7 + $0x18] sm:$0xff]
    %v193 = vld [vmem:[#allocation8] sm:$0x1]
    %v194 = vld [vmem:[#allocation10] sm:$0x1]
    %vm195 = vcmask 261120
    %v197 = vsel %vm195, %v165, 0
    %v200 = vsel %vm195, %v166, 0
    %v203 = vsel %vm195, %v167, 0
    %v206 = vsel %vm195, %v168, 0
    %v209 = vsel %vm195, %v169, 0
    %v212 = vsel %vm195, %v170, 0
    %v215 = vsel %vm195, %v171, 0
    %v218 = vsel %vm195, %v172, 0
    %220 = vmatprep.subr.mxu0 0.0
    %221 = vmatpush1.msra.mxu0 %v189
    %222 = vmatprep.subr.mxu0 0.0
    %223 = vmatpush1.msra.mxu0 %v190
    %224 = vmatprep.subr.mxu0 0.0
    %225 = vmatpush1.msra.mxu0 %v191
    %226 = vmatprep.subr.mxu0 0.0
    %227 = vmatpush1.msra.mxu0 %v192
    %228 = vmatprep.subr.mxu0 0.0
    %229 = vmatpush1.msra.mxu0 0.0
    %230 = vmatprep.subr.mxu0 0.0
    %231 = vmatpush1.msra.mxu0 0.0
    %232 = vmatprep.subr.mxu0 0.0
    %233 = vmatpush1.msra.mxu0 0.0
    %234 = vmatprep.subr.mxu0 0.0
    %235 = vmatpush1.msra.mxu0 0.0
    %236 = vmatprep.subr.mxu0 0.0
    %237 = vmatpush1.msra.mxu0 0.0
    %238 = vmatprep.subr.mxu0 0.0
    %239 = vmatpush1.msra.mxu0 0.0
    %240 = vmatprep.subr.mxu0 0.0
    %241 = vmatpush1.msra.mxu0 0.0
    %242 = vmatprep.subr.mxu0 0.0
    %243 = vmatpush1.msra.mxu0 0.0
    %244 = vmatprep.subr.mxu0 0.0
    %245 = vmatpush1.msra.mxu0 0.0
    %246 = vmatprep.subr.mxu0 0.0
    %247 = vmatpush1.msra.mxu0 0.0
    %248 = vmatprep.subr.mxu0 0.0
    %249 = vmatpush1.msra.mxu0 0.0
    %250 = vmatprep.subr.mxu0 0.0
    %251 = vmatpush1.msra.mxu0 0.0
    %252 = vmatprep.subr.mxu0 0.0
    %253 = vmatpush1.msra.mxu0 0.0
    %254 = vmatprep.subr.mxu0 0.0
    %255 = vmatpush1.msra.mxu0 0.0
    %256 = vmatprep.subr.mxu0 0.0
    %257 = vmatpush1.msra.mxu0 0.0
    %258 = vmatprep.subr.mxu0 0.0
    %259 = vmatpush1.msra.mxu0 0.0
    %260 = vmatprep.subr.mxu0 0.0
    %261 = vmatpush1.msra.mxu0 0.0
    %262 = vmatprep.subr.mxu0 0.0
    %263 = vmatpush1.msra.mxu0 0.0
    %264 = vmatprep.subr.mxu0 0.0
    %265 = vmatpush1.msra.mxu0 0.0
    %266 = vmatprep.subr.mxu0 0.0
    %267 = vmatpush1.msra.mxu0 0.0
    %268 = vmatprep.subr.mxu0 0.0
    %269 = vmatpush1.msra.mxu0 0.0
    %270 = vmatprep.subr.mxu0 0.0
    %271 = vmatpush1.msra.mxu0 0.0
    %272 = vmatprep.subr.mxu0 0.0
    %273 = vmatpush1.msra.mxu0 0.0
    %274 = vmatprep.subr.mxu0 0.0
    %275 = vmatpush1.msra.mxu0 0.0
    %276 = vmatprep.subr.mxu0 0.0
    %277 = vmatpush1.msra.mxu0 0.0
    %278 = vmatprep.subr.mxu0 0.0
    %279 = vmatpush1.msra.mxu0 0.0
    %280 = vmatprep.subr.mxu0 0.0
    %281 = vmatpush1.msra.mxu0 0.0
    %282 = vmatprep.subr.mxu0 0.0
    %283 = vmatpush1.msra.mxu0 0.0
    %284 = vmatprep.mubr.f32.mxu0 0.0
    %285 = vmatmul.mubr.f32.gmra.mrb[0].mxu0 %v197
    %v286 = vpop.f32.mrb[0].mxu0
    %v287 = vadd.f32 0.0, %v286
    %v288 = vpop.f32.mrb[0].mxu0
    %289 = vmatprep.mubr.f32.mxu0 0.0
    %290 = vmatmul.mubr.f32.gmra.mrb[0].mxu0 %v200
    %v291 = vpop.f32.mrb[0].mxu0
    %v292 = vadd.f32 0.0, %v291
    %v293 = vpop.f32.mrb[0].mxu0
    %294 = vmatprep.mubr.f32.mxu0 0.0
    %295 = vmatmul.mubr.f32.gmra.mrb[0].mxu0 %v203
    %v296 = vpop.f32.mrb[0].mxu0
    %v297 = vadd.f32 0.0, %v296
    %v298 = vpop.f32.mrb[0].mxu0
    %299 = vmatprep.mubr.f32.mxu0 0.0
    %300 = vmatmul.mubr.f32.gmra.mrb[0].mxu0 %v206
    %v301 = vpop.f32.mrb[0].mxu0
    %v302 = vadd.f32 0.0, %v301
    %v303 = vpop.f32.mrb[0].mxu0
    %304 = vmatprep.mubr.f32.mxu0 0.0
    %305 = vmatmul.mubr.f32.gmra.mrb[0].mxu0 %v209
    %v306 = vpop.f32.mrb[0].mxu0
    %v307 = vadd.f32 0.0, %v306
    %v308 = vpop.f32.mrb[0].mxu0
    %309 = vmatprep.mubr.f32.mxu0 0.0
    %310 = vmatmul.mubr.f32.gmra.mrb[0].mxu0 %v212
    %v311 = vpop.f32.mrb[0].mxu0
    %v312 = vadd.f32 0.0, %v311
    %v313 = vpop.f32.mrb[0].mxu0
    %314 = vmatprep.mubr.f32.mxu0 0.0
    %315 = vmatmul.mubr.f32.gmra.mrb[0].mxu0 %v215
    %v316 = vpop.f32.mrb[0].mxu0
    %v317 = vadd.f32 0.0, %v316
    %v318 = vpop.f32.mrb[0].mxu0
    %319 = vmatprep.mubr.f32.mxu0 0.0
    %320 = vmatmul.mubr.f32.gmra.mrb[0].mxu0 %v218
    %v321 = vpop.f32.mrb[0].mxu0
    %v322 = vadd.f32 0.0, %v321
    %v323 = vpop.f32.mrb[0].mxu0
    %324 = vdwg.mxu0
    %v326 = vlaneseq
    %v327 = vshrl.u32 %v326, 7
    %v328 = vsub.s32 0, %v327
    %v329 = vrot.slane %v193, %v328
    %v331 = vmul.f32 %v287, %v329
    %v332 = vmul.f32 %v292, %v329
    %v333 = vmul.f32 %v297, %v329
    %v334 = vmul.f32 %v302, %v329
    %v335 = vmul.f32 %v307, %v329
    %v336 = vmul.f32 %v312, %v329
    %v337 = vmul.f32 %v317, %v329
    %v338 = vmul.f32 %v322, %v329
    %v339 = vsel %vm195, %v331, 0.0
    %340 = vadd.xlane.f32.xlu0 %v339
    %v341 = vpop.xlane.xlu0 %340
    %v342 = vsel %vm195, %v332, 0.0
    %343 = vadd.xlane.f32.xlu0 %v342
    %v344 = vpop.xlane.xlu0 %343
    %v345 = vsel %vm195, %v333, 0.0
    %346 = vadd.xlane.f32.xlu0 %v345
    %v347 = vpop.xlane.xlu0 %346
    %v348 = vsel %vm195, %v334, 0.0
    %349 = vadd.xlane.f32.xlu0 %v348
    %v350 = vpop.xlane.xlu0 %349
    %v351 = vsel %vm195, %v335, 0.0
    %352 = vadd.xlane.f32.xlu0 %v351
    %v353 = vpop.xlane.xlu0 %352
    %v354 = vsel %vm195, %v336, 0.0
    %355 = vadd.xlane.f32.xlu0 %v354
    %v356 = vpop.xlane.xlu0 %355
    %v357 = vsel %vm195, %v337, 0.0
    %358 = vadd.xlane.f32.xlu0 %v357
    %v359 = vpop.xlane.xlu0 %358
    %v360 = vsel %vm195, %v338, 0.0
    %361 = vadd.xlane.f32.xlu0 %v360
    %v362 = vpop.xlane.xlu0 %361
    %v364 = vlaneseq
    %v365 = vshrl.u32 %v364, 7
    %v366 = vsub.s32 0, %v365
    %v367 = vrot.slane %v194, %v366
    %v369 = vmul.f32 %v287, %v367
    %v370 = vmul.f32 %v292, %v367
    %v371 = vmul.f32 %v297, %v367
    %v372 = vmul.f32 %v302, %v367
    %v373 = vmul.f32 %v307, %v367
    %v374 = vmul.f32 %v312, %v367
    %v375 = vmul.f32 %v317, %v367
    %v376 = vmul.f32 %v322, %v367
    %v377 = vsel %vm195, %v369, 0.0
    %378 = vadd.xlane.f32.xlu0 %v377
    %v379 = vpop.xlane.xlu0 %378
    %v380 = vsel %vm195, %v370, 0.0
    %381 = vadd.xlane.f32.xlu0 %v380
    %v382 = vpop.xlane.xlu0 %381
    %v383 = vsel %vm195, %v371, 0.0
    %384 = vadd.xlane.f32.xlu0 %v383
    %v385 = vpop.xlane.xlu0 %384
    %v386 = vsel %vm195, %v372, 0.0
    %387 = vadd.xlane.f32.xlu0 %v386
    %v388 = vpop.xlane.xlu0 %387
    %v389 = vsel %vm195, %v373, 0.0
    %390 = vadd.xlane.f32.xlu0 %v389
    %v391 = vpop.xlane.xlu0 %390
    %v392 = vsel %vm195, %v374, 0.0
    %393 = vadd.xlane.f32.xlu0 %v392
    %v394 = vpop.xlane.xlu0 %393
    %v395 = vsel %vm195, %v375, 0.0
    %396 = vadd.xlane.f32.xlu0 %v395
    %v397 = vpop.xlane.xlu0 %396
    %v398 = vsel %vm195, %v376, 0.0
    %399 = vadd.xlane.f32.xlu0 %v398
    %v400 = vpop.xlane.xlu0 %399
    %401 = vxpose.xlu0.b32.start [1/16] %v379, 128
    %402 = vxpose.xlu0.b32.cont [2/16] %v382, 128
    %403 = vxpose.xlu0.b32.cont [3/16] %v385, 128
    %404 = vxpose.xlu0.b32.cont [4/16] %v388, 128
    %405 = vxpose.xlu0.b32.cont [5/16] %v391, 128
    %406 = vxpose.xlu0.b32.cont [6/16] %v394, 128
    %407 = vxpose.xlu0.b32.cont [7/16] %v397, 128
    %408 = vxpose.xlu0.b32.cont [8/16] %v400, 128
    %409 = vxpose.xlu0.b32.cont [9/16] 0.0, 128
    %410 = vxpose.xlu0.b32.cont [10/16] 0.0, 128
    %411 = vxpose.xlu0.b32.cont [11/16] 0.0, 128
    %412 = vxpose.xlu0.b32.cont [12/16] 0.0, 128
    %413 = vxpose.xlu0.b32.cont [13/16] 0.0, 128
    %414 = vxpose.xlu0.b32.cont [14/16] 0.0, 128
    %415 = vxpose.xlu0.b32.cont [15/16] 0.0, 128
    %416 = vxpose.xlu0.b32.end [16/16] 0.0, 128
    %v417 = vpop.trf.xlu0
    %v418 = vpop.trf.xlu0
    %v419 = vpop.trf.xlu0
    %v420 = vpop.trf.xlu0
    %v421 = vpop.trf.xlu0
    %v422 = vpop.trf.xlu0
    %v423 = vpop.trf.xlu0
    %v424 = vpop.trf.xlu0
    %v425 = vpop.trf.xlu0
    %v426 = vpop.trf.xlu0
    %v427 = vpop.trf.xlu0
    %v428 = vpop.trf.xlu0
    %v429 = vpop.trf.xlu0
    %v430 = vpop.trf.xlu0
    %v431 = vpop.trf.xlu0
    %v432 = vpop.trf.xlu0
    %v433 = vlaneseq
    %v434 = vshrl.u32 %v433, 7
    %v435 = vsub.s32 0, %v434
    %v436 = vrot.slane %v417, %v435
    %v437 = vadd.f32 %v341, %v436
    %v438 = vadd.f32 %v344, %v436
    %v439 = vadd.f32 %v347, %v436
    %v440 = vadd.f32 %v350, %v436
    %v441 = vadd.f32 %v353, %v436
    %v442 = vadd.f32 %v356, %v436
    %v443 = vadd.f32 %v359, %v436
    %v444 = vadd.f32 %v362, %v436
    %vm445 = vcmp.gt.f32.partialorder %v437, 0.0
    %vm446 = vcmp.gt.f32.partialorder %v438, 0.0
    %vm447 = vcmp.gt.f32.partialorder %v439, 0.0
    %vm448 = vcmp.gt.f32.partialorder %v440, 0.0
    %vm449 = vcmp.gt.f32.partialorder %v441, 0.0
    %vm450 = vcmp.gt.f32.partialorder %v442, 0.0
    %vm451 = vcmp.gt.f32.partialorder %v443, 0.0
    %vm452 = vcmp.gt.f32.partialorder %v444, 0.0
    %v453 = vmul.f32 %v437, 0.05
    %v454 = vmul.f32 %v438, 0.05
    %v455 = vmul.f32 %v439, 0.05
    %v456 = vmul.f32 %v440, 0.05
    %v457 = vmul.f32 %v441, 0.05
    %v458 = vmul.f32 %v442, 0.05
    %v459 = vmul.f32 %v443, 0.05
    %v460 = vmul.f32 %v444, 0.05
    %v461 = vsel %vm445, %v437, %v453
    %v462 = vsel %vm446, %v438, %v454
    %v463 = vsel %vm447, %v439, %v455
    %v464 = vsel %vm448, %v440, %v456
    %v465 = vsel %vm449, %v441, %v457
    %v466 = vsel %vm450, %v442, %v458
    %v467 = vsel %vm451, %v443, %v459
    %v468 = vsel %vm452, %v444, %v460
    %v469 = vsel %vm181, %v461, -1e+30
    %v470 = vsel %vm182, %v462, -1e+30
    %v471 = vsel %vm183, %v463, -1e+30
    %v472 = vsel %vm184, %v464, -1e+30
    %v473 = vsel %vm185, %v465, -1e+30
    %v474 = vsel %vm186, %v466, -1e+30
    %v475 = vsel %vm187, %v467, -1e+30
    %v476 = vsel %vm188, %v468, -1e+30
    %vm477 = vcmask 523264
    %v478 = vsel %vm477, %v469, -inf
    %479 = vmax.xlane.f32.xlu0 %v478
    %v480 = vpop.xlane.xlu0 %479
    %v481 = vsel %vm477, %v470, -inf
    %482 = vmax.xlane.f32.xlu0 %v481
    %v483 = vpop.xlane.xlu0 %482
    %v484 = vsel %vm477, %v471, -inf
    %485 = vmax.xlane.f32.xlu0 %v484
    %v486 = vpop.xlane.xlu0 %485
    %v487 = vsel %vm477, %v472, -inf
    %488 = vmax.xlane.f32.xlu0 %v487
    %v489 = vpop.xlane.xlu0 %488
    %v490 = vsel %vm477, %v473, -inf
    %491 = vmax.xlane.f32.xlu0 %v490
    %v492 = vpop.xlane.xlu0 %491
    %v493 = vsel %vm477, %v474, -inf
    %494 = vmax.xlane.f32.xlu0 %v493
    %v495 = vpop.xlane.xlu0 %494
    %v496 = vsel %vm477, %v475, -inf
    %497 = vmax.xlane.f32.xlu0 %v496
    %v498 = vpop.xlane.xlu0 %497
    %v499 = vsel %vm477, %v476, -inf
    %500 = vmax.xlane.f32.xlu0 %v499
    %v501 = vpop.xlane.xlu0 %500
    %v502 = vmax.f32 %v480, 0.0
    %v503 = vmax.f32 %v483, 0.0
    %v504 = vmax.f32 %v486, 0.0
    %v505 = vmax.f32 %v489, 0.0
    %v506 = vmax.f32 %v492, 0.0
    %v507 = vmax.f32 %v495, 0.0
    %v508 = vmax.f32 %v498, 0.0
    %v509 = vmax.f32 %v501, 0.0
    %v510 = vsub.f32 %v469, %v502
    %v511 = vsub.f32 %v470, %v503
    %v512 = vsub.f32 %v471, %v504
    %v513 = vsub.f32 %v472, %v505
    %v514 = vsub.f32 %v473, %v506
    %v515 = vsub.f32 %v474, %v507
    %v516 = vsub.f32 %v475, %v508
    %v517 = vsub.f32 %v476, %v509
    %v518 = vmul.f32 %v510, 1.442695
    %v519 = vpow.pop %v518
    %v520 = vmul.f32 %v511, 1.442695
    %v521 = vpow.pop %v520
    %v522 = vmul.f32 %v512, 1.442695
    %v523 = vpow.pop %v522
    %v524 = vmul.f32 %v513, 1.442695
    %v525 = vpow.pop %v524
    %v526 = vmul.f32 %v514, 1.442695
    %v527 = vpow.pop %v526
    %v528 = vmul.f32 %v515, 1.442695
    %v529 = vpow.pop %v528
    %v530 = vmul.f32 %v516, 1.442695
    %v531 = vpow.pop %v530
    %v532 = vmul.f32 %v517, 1.442695
    %v533 = vpow.pop %v532
    %v534 = vsel %vm477, %v519, 0.0
    %535 = vadd.xlane.f32.xlu0 %v534
    %v536 = vpop.xlane.xlu0 %535
    %v537 = vsel %vm477, %v521, 0.0
    %538 = vadd.xlane.f32.xlu0 %v537
    %v539 = vpop.xlane.xlu0 %538
    %v540 = vsel %vm477, %v523, 0.0
    %541 = vadd.xlane.f32.xlu0 %v540
    %v542 = vpop.xlane.xlu0 %541
    %v543 = vsel %vm477, %v525, 0.0
    %544 = vadd.xlane.f32.xlu0 %v543
    %v545 = vpop.xlane.xlu0 %544
    %v546 = vsel %vm477, %v527, 0.0
    %547 = vadd.xlane.f32.xlu0 %v546
    %v548 = vpop.xlane.xlu0 %547
    %v549 = vsel %vm477, %v529, 0.0
    %550 = vadd.xlane.f32.xlu0 %v549
    %v551 = vpop.xlane.xlu0 %550
    %v552 = vsel %vm477, %v531, 0.0
    %553 = vadd.xlane.f32.xlu0 %v552
    %v554 = vpop.xlane.xlu0 %553
    %v555 = vsel %vm477, %v533, 0.0
    %556 = vadd.xlane.f32.xlu0 %v555
    %v557 = vpop.xlane.xlu0 %556
    %vm558 = vcmp.eq.f32.partialorder %v536, 0.0
    %vm559 = vcmp.eq.f32.partialorder %v539, 0.0
    %vm560 = vcmp.eq.f32.partialorder %v542, 0.0
    %vm561 = vcmp.eq.f32.partialorder %v545, 0.0
    %vm562 = vcmp.eq.f32.partialorder %v548, 0.0
    %vm563 = vcmp.eq.f32.partialorder %v551, 0.0
    %vm564 = vcmp.eq.f32.partialorder %v554, 0.0
    %vm565 = vcmp.eq.f32.partialorder %v557, 0.0
    %v566 = vsel %vm558, 1.0, %v536
    %v567 = vsel %vm559, 1.0, %v539
    %v568 = vsel %vm560, 1.0, %v542
    %v569 = vsel %vm561, 1.0, %v545
    %v570 = vsel %vm562, 1.0, %v548
    %v571 = vsel %vm563, 1.0, %v551
    %v572 = vsel %vm564, 1.0, %v554
    %v573 = vsel %vm565, 1.0, %v557
    %v574 = vrcp.pop %v566
    %v575 = vmul.f32 1.0, %v574
    %v576 = vrcp.pop %v567
    %v577 = vmul.f32 1.0, %v576
    %v578 = vrcp.pop %v568
    %v579 = vmul.f32 1.0, %v578
    %v580 = vrcp.pop %v569
    %v581 = vmul.f32 1.0, %v580
    %v582 = vrcp.pop %v570
    %v583 = vmul.f32 1.0, %v582
    %v584 = vrcp.pop %v571
    %v585 = vmul.f32 1.0, %v584
    %v586 = vrcp.pop %v572
    %v587 = vmul.f32 1.0, %v586
    %v588 = vrcp.pop %v573
    %v589 = vmul.f32 1.0, %v588
    %v591 = vsel %vm477, %v519, 0
    %v594 = vsel %vm477, %v521, 0
    %v597 = vsel %vm477, %v523, 0
    %v600 = vsel %vm477, %v525, 0
    %v603 = vsel %vm477, %v527, 0
    %v606 = vsel %vm477, %v529, 0
    %v609 = vsel %vm477, %v531, 0
    %v612 = vsel %vm477, %v533, 0
    %614 = vmatprep.subr.mxu0 0.0
    %615 = vmatpush1.msra.mxu0 %v287
    %616 = vmatprep.subr.mxu0 0.0
    %617 = vmatpush1.msra.mxu0 %v292
    %618 = vmatprep.subr.mxu0 0.0
    %619 = vmatpush1.msra.mxu0 %v297
    %620 = vmatprep.subr.mxu0 0.0
    %621 = vmatpush1.msra.mxu0 %v302
    %622 = vmatprep.subr.mxu0 0.0
    %623 = vmatpush1.msra.mxu0 %v307
    %624 = vmatprep.subr.mxu0 0.0
    %625 = vmatpush1.msra.mxu0 %v312
    %626 = vmatprep.subr.mxu0 0.0
    %627 = vmatpush1.msra.mxu0 %v317
    %628 = vmatprep.subr.mxu0 0.0
    %629 = vmatpush1.msra.mxu0 %v322
    %630 = vmatprep.subr.mxu0 0.0
    %631 = vmatpush1.msra.mxu0 0.0
    %632 = vmatprep.subr.mxu0 0.0
    %633 = vmatpush1.msra.mxu0 0.0
    %634 = vmatprep.subr.mxu0 0.0
    %635 = vmatpush1.msra.mxu0 0.0
    %636 = vmatprep.subr.mxu0 0.0
    %637 = vmatpush1.msra.mxu0 0.0
    %638 = vmatprep.subr.mxu0 0.0
    %639 = vmatpush1.msra.mxu0 0.0
    %640 = vmatprep.subr.mxu0 0.0
    %641 = vmatpush1.msra.mxu0 0.0
    %642 = vmatprep.subr.mxu0 0.0
    %643 = vmatpush1.msra.mxu0 0.0
    %644 = vmatprep.subr.mxu0 0.0
    %645 = vmatpush1.msra.mxu0 0.0
    %646 = vmatprep.subr.mxu0 0.0
    %647 = vmatpush1.msra.mxu0 0.0
    %648 = vmatprep.subr.mxu0 0.0
    %649 = vmatpush1.msra.mxu0 0.0
    %650 = vmatprep.subr.mxu0 0.0
    %651 = vmatpush1.msra.mxu0 0.0
    %652 = vmatprep.subr.mxu0 0.0
    %653 = vmatpush1.msra.mxu0 0.0
    %654 = vmatprep.subr.mxu0 0.0
    %655 = vmatpush1.msra.mxu0 0.0
    %656 = vmatprep.subr.mxu0 0.0
    %657 = vmatpush1.msra.mxu0 0.0
    %658 = vmatprep.subr.mxu0 0.0
    %659 = vmatpush1.msra.mxu0 0.0
    %660 = vmatprep.subr.mxu0 0.0
    %661 = vmatpush1.msra.mxu0 0.0
    %662 = vmatprep.subr.mxu0 0.0
    %663 = vmatpush1.msra.mxu0 0.0
    %664 = vmatprep.subr.mxu0 0.0
    %665 = vmatpush1.msra.mxu0 0.0
    %666 = vmatprep.subr.mxu0 0.0
    %667 = vmatpush1.msra.mxu0 0.0
    %668 = vmatprep.subr.mxu0 0.0
    %669 = vmatpush1.msra.mxu0 0.0
    %670 = vmatprep.subr.mxu0 0.0
    %671 = vmatpush1.msra.mxu0 0.0
    %672 = vmatprep.subr.mxu0 0.0
    %673 = vmatpush1.msra.mxu0 0.0
    %674 = vmatprep.subr.mxu0 0.0
    %675 = vmatpush1.msra.mxu0 0.0
    %676 = vmatprep.subr.mxu0 0.0
    %677 = vmatpush1.msra.mxu0 0.0
    %678 = vmatprep.mubr.f32.mxu0 0.0
    %679 = vmatmul.mubr.f32.gmra.mrb[0].mxu0 %v591
    %v680 = vpop.f32.mrb[0].mxu0
    %v681 = vadd.f32 0.0, %v680
    %v682 = vpop.f32.mrb[0].mxu0
    %683 = vmatprep.mubr.f32.mxu0 0.0
    %684 = vmatmul.mubr.f32.gmra.mrb[0].mxu0 %v594
    %v685 = vpop.f32.mrb[0].mxu0
    %v686 = vadd.f32 0.0, %v685
    %v687 = vpop.f32.mrb[0].mxu0
    %688 = vmatprep.mubr.f32.mxu0 0.0
    %689 = vmatmul.mubr.f32.gmra.mrb[0].mxu0 %v597
    %v690 = vpop.f32.mrb[0].mxu0
    %v691 = vadd.f32 0.0, %v690
    %v692 = vpop.f32.mrb[0].mxu0
    %693 = vmatprep.mubr.f32.mxu0 0.0
    %694 = vmatmul.mubr.f32.gmra.mrb[0].mxu0 %v600
    %v695 = vpop.f32.mrb[0].mxu0
    %v696 = vadd.f32 0.0, %v695
    %v697 = vpop.f32.mrb[0].mxu0
    %698 = vmatprep.mubr.f32.mxu0 0.0
    %699 = vmatmul.mubr.f32.gmra.mrb[0].mxu0 %v603
    %v700 = vpop.f32.mrb[0].mxu0
    %v701 = vadd.f32 0.0, %v700
    %v702 = vpop.f32.mrb[0].mxu0
    %703 = vmatprep.mubr.f32.mxu0 0.0
    %704 = vmatmul.mubr.f32.gmra.mrb[0].mxu0 %v606
    %v705 = vpop.f32.mrb[0].mxu0
    %v706 = vadd.f32 0.0, %v705
    %v707 = vpop.f32.mrb[0].mxu0
    %708 = vmatprep.mubr.f32.mxu0 0.0
    %709 = vmatmul.mubr.f32.gmra.mrb[0].mxu0 %v609
    %v710 = vpop.f32.mrb[0].mxu0
    %v711 = vadd.f32 0.0, %v710
    %v712 = vpop.f32.mrb[0].mxu0
    %713 = vmatprep.mubr.f32.mxu0 0.0
    %714 = vmatmul.mubr.f32.gmra.mrb[0].mxu0 %v612
    %v715 = vpop.f32.mrb[0].mxu0
    %v716 = vadd.f32 0.0, %v715
    %v717 = vpop.f32.mrb[0].mxu0
    %718 = vdwg.mxu0
    %v719 = vmul.f32 %v681, %v575
    %v720 = vmul.f32 %v686, %v577
    %v721 = vmul.f32 %v691, %v579
    %v722 = vmul.f32 %v696, %v581
    %v723 = vmul.f32 %v701, %v583
    %v724 = vmul.f32 %v706, %v585
    %v725 = vmul.f32 %v711, %v587
    %v726 = vmul.f32 %v716, %v589
    %v727 = vmax.f32 %v719, 0.0
    %v728 = vmax.f32 %v720, 0.0
    %v729 = vmax.f32 %v721, 0.0
    %v730 = vmax.f32 %v722, 0.0
    %v731 = vmax.f32 %v723, 0.0
    %v732 = vmax.f32 %v724, 0.0
    %v733 = vmax.f32 %v725, 0.0
    %v734 = vmax.f32 %v726, 0.0
    %v735 = vld [vmem:[#allocation11] sm:$0xff]
    %v736 = vld [vmem:[#allocation11 + $0x8] sm:$0xff]
    %v737 = vld [vmem:[#allocation11 + $0x10] sm:$0xff]
    %v738 = vld [vmem:[#allocation11 + $0x18] sm:$0xff]
    %v739 = vld [vmem:[#allocation13] sm:$0x1]
    %v740 = vld [vmem:[#allocation14] sm:$0x1]
    %v742 = vsel %vm195, %v727, 0
    %v745 = vsel %vm195, %v728, 0
    %v748 = vsel %vm195, %v729, 0
    %v751 = vsel %vm195, %v730, 0
    %v754 = vsel %vm195, %v731, 0
    %v757 = vsel %vm195, %v732, 0
    %v760 = vsel %vm195, %v733, 0
    %v763 = vsel %vm195, %v734, 0
    %765 = vmatprep.subr.mxu0 0.0
    %766 = vmatpush1.msra.mxu0 %v735
    %767 = vmatprep.subr.mxu0 0.0
    %768 = vmatpush1.msra.mxu0 %v736
    %769 = vmatprep.subr.mxu0 0.0
    %770 = vmatpush1.msra.mxu0 %v737
    %771 = vmatprep.subr.mxu0 0.0
    %772 = vmatpush1.msra.mxu0 %v738
    %773 = vmatprep.subr.mxu0 0.0
    %774 = vmatpush1.msra.mxu0 0.0
    %775 = vmatprep.subr.mxu0 0.0
    %776 = vmatpush1.msra.mxu0 0.0
    %777 = vmatprep.subr.mxu0 0.0
    %778 = vmatpush1.msra.mxu0 0.0
    %779 = vmatprep.subr.mxu0 0.0
    %780 = vmatpush1.msra.mxu0 0.0
    %781 = vmatprep.subr.mxu0 0.0
    %782 = vmatpush1.msra.mxu0 0.0
    %783 = vmatprep.subr.mxu0 0.0
    %784 = vmatpush1.msra.mxu0 0.0
    %785 = vmatprep.subr.mxu0 0.0
    %786 = vmatpush1.msra.mxu0 0.0
    %787 = vmatprep.subr.mxu0 0.0
    %788 = vmatpush1.msra.mxu0 0.0
    %789 = vmatprep.subr.mxu0 0.0
    %790 = vmatpush1.msra.mxu0 0.0
    %791 = vmatprep.subr.mxu0 0.0
    %792 = vmatpush1.msra.mxu0 0.0
    %793 = vmatprep.subr.mxu0 0.0
    %794 = vmatpush1.msra.mxu0 0.0
    %795 = vmatprep.subr.mxu0 0.0
    %796 = vmatpush1.msra.mxu0 0.0
    %797 = vmatprep.subr.mxu0 0.0
    %798 = vmatpush1.msra.mxu0 0.0
    %799 = vmatprep.subr.mxu0 0.0
    %800 = vmatpush1.msra.mxu0 0.0
    %801 = vmatprep.subr.mxu0 0.0
    %802 = vmatpush1.msra.mxu0 0.0
    %803 = vmatprep.subr.mxu0 0.0
    %804 = vmatpush1.msra.mxu0 0.0
    %805 = vmatprep.subr.mxu0 0.0
    %806 = vmatpush1.msra.mxu0 0.0
    %807 = vmatprep.subr.mxu0 0.0
    %808 = vmatpush1.msra.mxu0 0.0
    %809 = vmatprep.subr.mxu0 0.0
    %810 = vmatpush1.msra.mxu0 0.0
    %811 = vmatprep.subr.mxu0 0.0
    %812 = vmatpush1.msra.mxu0 0.0
    %813 = vmatprep.subr.mxu0 0.0
    %814 = vmatpush1.msra.mxu0 0.0
    %815 = vmatprep.subr.mxu0 0.0
    %816 = vmatpush1.msra.mxu0 0.0
    %817 = vmatprep.subr.mxu0 0.0
    %818 = vmatpush1.msra.mxu0 0.0
    %819 = vmatprep.subr.mxu0 0.0
    %820 = vmatpush1.msra.mxu0 0.0
    %821 = vmatprep.subr.mxu0 0.0
    %822 = vmatpush1.msra.mxu0 0.0
    %823 = vmatprep.subr.mxu0 0.0
    %824 = vmatpush1.msra.mxu0 0.0
    %825 = vmatprep.subr.mxu0 0.0
    %826 = vmatpush1.msra.mxu0 0.0
    %827 = vmatprep.subr.mxu0 0.0
    %828 = vmatpush1.msra.mxu0 0.0
    %829 = vmatprep.mubr.f32.mxu0 0.0
    %830 = vmatmul.mubr.f32.gmra.mrb[0].mxu0 %v742
    %v831 = vpop.f32.mrb[0].mxu0
    %v832 = vadd.f32 0.0, %v831
    %v833 = vpop.f32.mrb[0].mxu0
    %834 = vmatprep.mubr.f32.mxu0 0.0
    %835 = vmatmul.mubr.f32.gmra.mrb[0].mxu0 %v745
    %v836 = vpop.f32.mrb[0].mxu0
    %v837 = vadd.f32 0.0, %v836
    %v838 = vpop.f32.mrb[0].mxu0
    %839 = vmatprep.mubr.f32.mxu0 0.0
    %840 = vmatmul.mubr.f32.gmra.mrb[0].mxu0 %v748
    %v841 = vpop.f32.mrb[0].mxu0
    %v842 = vadd.f32 0.0, %v841
    %v843 = vpop.f32.mrb[0].mxu0
    %844 = vmatprep.mubr.f32.mxu0 0.0
    %845 = vmatmul.mubr.f32.gmra.mrb[0].mxu0 %v751
    %v846 = vpop.f32.mrb[0].mxu0
    %v847 = vadd.f32 0.0, %v846
    %v848 = vpop.f32.mrb[0].mxu0
    %849 = vmatprep.mubr.f32.mxu0 0.0
    %850 = vmatmul.mubr.f32.gmra.mrb[0].mxu0 %v754
    %v851 = vpop.f32.mrb[0].mxu0
    %v852 = vadd.f32 0.0, %v851
    %v853 = vpop.f32.mrb[0].mxu0
    %854 = vmatprep.mubr.f32.mxu0 0.0
    %855 = vmatmul.mubr.f32.gmra.mrb[0].mxu0 %v757
    %v856 = vpop.f32.mrb[0].mxu0
    %v857 = vadd.f32 0.0, %v856
    %v858 = vpop.f32.mrb[0].mxu0
    %859 = vmatprep.mubr.f32.mxu0 0.0
    %860 = vmatmul.mubr.f32.gmra.mrb[0].mxu0 %v760
    %v861 = vpop.f32.mrb[0].mxu0
    %v862 = vadd.f32 0.0, %v861
    %v863 = vpop.f32.mrb[0].mxu0
    %864 = vmatprep.mubr.f32.mxu0 0.0
    %865 = vmatmul.mubr.f32.gmra.mrb[0].mxu0 %v763
    %v866 = vpop.f32.mrb[0].mxu0
    %v867 = vadd.f32 0.0, %v866
    %v868 = vpop.f32.mrb[0].mxu0
    %869 = vdwg.mxu0
    %v871 = vlaneseq
    %v872 = vshrl.u32 %v871, 7
    %v873 = vsub.s32 0, %v872
    %v874 = vrot.slane %v739, %v873
    %v876 = vmul.f32 %v832, %v874
    %v877 = vmul.f32 %v837, %v874
    %v878 = vmul.f32 %v842, %v874
    %v879 = vmul.f32 %v847, %v874
    %v880 = vmul.f32 %v852, %v874
    %v881 = vmul.f32 %v857, %v874
    %v882 = vmul.f32 %v862, %v874
    %v883 = vmul.f32 %v867, %v874
    %v884 = vsel %vm195, %v876, 0.0
    %885 = vadd.xlane.f32.xlu0 %v884
    %v886 = vpop.xlane.xlu0 %885
    %v887 = vsel %vm195, %v877, 0.0
    %888 = vadd.xlane.f32.xlu0 %v887
    %v889 = vpop.xlane.xlu0 %888
    %v890 = vsel %vm195, %v878, 0.0
    %891 = vadd.xlane.f32.xlu0 %v890
    %v892 = vpop.xlane.xlu0 %891
    %v893 = vsel %vm195, %v879, 0.0
    %894 = vadd.xlane.f32.xlu0 %v893
    %v895 = vpop.xlane.xlu0 %894
    %v896 = vsel %vm195, %v880, 0.0
    %897 = vadd.xlane.f32.xlu0 %v896
    %v898 = vpop.xlane.xlu0 %897
    %v899 = vsel %vm195, %v881, 0.0
    %900 = vadd.xlane.f32.xlu0 %v899
    %v901 = vpop.xlane.xlu0 %900
    %v902 = vsel %vm195, %v882, 0.0
    %903 = vadd.xlane.f32.xlu0 %v902
    %v904 = vpop.xlane.xlu0 %903
    %v905 = vsel %vm195, %v883, 0.0
    %906 = vadd.xlane.f32.xlu0 %v905
    %v907 = vpop.xlane.xlu0 %906
    %v909 = vlaneseq
    %v910 = vshrl.u32 %v909, 7
    %v911 = vsub.s32 0, %v910
    %v912 = vrot.slane %v740, %v911
    %v914 = vmul.f32 %v832, %v912
    %v915 = vmul.f32 %v837, %v912
    %v916 = vmul.f32 %v842, %v912
    %v917 = vmul.f32 %v847, %v912
    %v918 = vmul.f32 %v852, %v912
    %v919 = vmul.f32 %v857, %v912
    %v920 = vmul.f32 %v862, %v912
    %v921 = vmul.f32 %v867, %v912
    %v922 = vsel %vm195, %v914, 0.0
    %923 = vadd.xlane.f32.xlu0 %v922
    %v924 = vpop.xlane.xlu0 %923
    %v925 = vsel %vm195, %v915, 0.0
    %926 = vadd.xlane.f32.xlu0 %v925
    %v927 = vpop.xlane.xlu0 %926
    %v928 = vsel %vm195, %v916, 0.0
    %929 = vadd.xlane.f32.xlu0 %v928
    %v930 = vpop.xlane.xlu0 %929
    %v931 = vsel %vm195, %v917, 0.0
    %932 = vadd.xlane.f32.xlu0 %v931
    %v933 = vpop.xlane.xlu0 %932
    %v934 = vsel %vm195, %v918, 0.0
    %935 = vadd.xlane.f32.xlu0 %v934
    %v936 = vpop.xlane.xlu0 %935
    %v937 = vsel %vm195, %v919, 0.0
    %938 = vadd.xlane.f32.xlu0 %v937
    %v939 = vpop.xlane.xlu0 %938
    %v940 = vsel %vm195, %v920, 0.0
    %941 = vadd.xlane.f32.xlu0 %v940
    %v942 = vpop.xlane.xlu0 %941
    %v943 = vsel %vm195, %v921, 0.0
    %944 = vadd.xlane.f32.xlu0 %v943
    %v945 = vpop.xlane.xlu0 %944
    %946 = vxpose.xlu0.b32.start [1/16] %v924, 128
    %947 = vxpose.xlu0.b32.cont [2/16] %v927, 128
    %948 = vxpose.xlu0.b32.cont [3/16] %v930, 128
    %949 = vxpose.xlu0.b32.cont [4/16] %v933, 128
    %950 = vxpose.xlu0.b32.cont [5/16] %v936, 128
    %951 = vxpose.xlu0.b32.cont [6/16] %v939, 128
    %952 = vxpose.xlu0.b32.cont [7/16] %v942, 128
    %953 = vxpose.xlu0.b32.cont [8/16] %v945, 128
    %954 = vxpose.xlu0.b32.cont [9/16] 0.0, 128
    %955 = vxpose.xlu0.b32.cont [10/16] 0.0, 128
    %956 = vxpose.xlu0.b32.cont [11/16] 0.0, 128
    %957 = vxpose.xlu0.b32.cont [12/16] 0.0, 128
    %958 = vxpose.xlu0.b32.cont [13/16] 0.0, 128
    %959 = vxpose.xlu0.b32.cont [14/16] 0.0, 128
    %960 = vxpose.xlu0.b32.cont [15/16] 0.0, 128
    %961 = vxpose.xlu0.b32.end [16/16] 0.0, 128
    %v962 = vpop.trf.xlu0
    %v963 = vpop.trf.xlu0
    %v964 = vpop.trf.xlu0
    %v965 = vpop.trf.xlu0
    %v966 = vpop.trf.xlu0
    %v967 = vpop.trf.xlu0
    %v968 = vpop.trf.xlu0
    %v969 = vpop.trf.xlu0
    %v970 = vpop.trf.xlu0
    %v971 = vpop.trf.xlu0
    %v972 = vpop.trf.xlu0
    %v973 = vpop.trf.xlu0
    %v974 = vpop.trf.xlu0
    %v975 = vpop.trf.xlu0
    %v976 = vpop.trf.xlu0
    %v977 = vpop.trf.xlu0
    %v978 = vlaneseq
    %v979 = vshrl.u32 %v978, 7
    %v980 = vsub.s32 0, %v979
    %v981 = vrot.slane %v962, %v980
    %v982 = vadd.f32 %v886, %v981
    %v983 = vadd.f32 %v889, %v981
    %v984 = vadd.f32 %v892, %v981
    %v985 = vadd.f32 %v895, %v981
    %v986 = vadd.f32 %v898, %v981
    %v987 = vadd.f32 %v901, %v981
    %v988 = vadd.f32 %v904, %v981
    %v989 = vadd.f32 %v907, %v981
    %vm990 = vcmp.gt.f32.partialorder %v982, 0.0
    %vm991 = vcmp.gt.f32.partialorder %v983, 0.0
    %vm992 = vcmp.gt.f32.partialorder %v984, 0.0
    %vm993 = vcmp.gt.f32.partialorder %v985, 0.0
    %vm994 = vcmp.gt.f32.partialorder %v986, 0.0
    %vm995 = vcmp.gt.f32.partialorder %v987, 0.0
    %vm996 = vcmp.gt.f32.partialorder %v988, 0.0
    %vm997 = vcmp.gt.f32.partialorder %v989, 0.0
    %v998 = vmul.f32 %v982, 0.05
    %v999 = vmul.f32 %v983, 0.05
    %v1000 = vmul.f32 %v984, 0.05
    %v1001 = vmul.f32 %v985, 0.05
    %v1002 = vmul.f32 %v986, 0.05
    %v1003 = vmul.f32 %v987, 0.05
    %v1004 = vmul.f32 %v988, 0.05
    %v1005 = vmul.f32 %v989, 0.05
    %v1006 = vsel %vm990, %v982, %v998
    %v1007 = vsel %vm991, %v983, %v999
    %v1008 = vsel %vm992, %v984, %v1000
    %v1009 = vsel %vm993, %v985, %v1001
    %v1010 = vsel %vm994, %v986, %v1002
    %v1011 = vsel %vm995, %v987, %v1003
    %v1012 = vsel %vm996, %v988, %v1004
    %v1013 = vsel %vm997, %v989, %v1005
    %v1014 = vsel %vm181, %v1006, -1e+30
    %v1015 = vsel %vm182, %v1007, -1e+30
    %v1016 = vsel %vm183, %v1008, -1e+30
    %v1017 = vsel %vm184, %v1009, -1e+30
    %v1018 = vsel %vm185, %v1010, -1e+30
    %v1019 = vsel %vm186, %v1011, -1e+30
    %v1020 = vsel %vm187, %v1012, -1e+30
    %v1021 = vsel %vm188, %v1013, -1e+30
    %v1022 = vsel %vm477, %v1014, -inf
    %1023 = vmax.xlane.f32.xlu0 %v1022
    %v1024 = vpop.xlane.xlu0 %1023
    %v1025 = vsel %vm477, %v1015, -inf
    %1026 = vmax.xlane.f32.xlu0 %v1025
    %v1027 = vpop.xlane.xlu0 %1026
    %v1028 = vsel %vm477, %v1016, -inf
    %1029 = vmax.xlane.f32.xlu0 %v1028
    %v1030 = vpop.xlane.xlu0 %1029
    %v1031 = vsel %vm477, %v1017, -inf
    %1032 = vmax.xlane.f32.xlu0 %v1031
    %v1033 = vpop.xlane.xlu0 %1032
    %v1034 = vsel %vm477, %v1018, -inf
    %1035 = vmax.xlane.f32.xlu0 %v1034
    %v1036 = vpop.xlane.xlu0 %1035
    %v1037 = vsel %vm477, %v1019, -inf
    %1038 = vmax.xlane.f32.xlu0 %v1037
    %v1039 = vpop.xlane.xlu0 %1038
    %v1040 = vsel %vm477, %v1020, -inf
    %1041 = vmax.xlane.f32.xlu0 %v1040
    %v1042 = vpop.xlane.xlu0 %1041
    %v1043 = vsel %vm477, %v1021, -inf
    %1044 = vmax.xlane.f32.xlu0 %v1043
    %v1045 = vpop.xlane.xlu0 %1044
    %v1046 = vmax.f32 %v1024, 0.0
    %v1047 = vmax.f32 %v1027, 0.0
    %v1048 = vmax.f32 %v1030, 0.0
    %v1049 = vmax.f32 %v1033, 0.0
    %v1050 = vmax.f32 %v1036, 0.0
    %v1051 = vmax.f32 %v1039, 0.0
    %v1052 = vmax.f32 %v1042, 0.0
    %v1053 = vmax.f32 %v1045, 0.0
    %v1054 = vsub.f32 %v1014, %v1046
    %v1055 = vsub.f32 %v1015, %v1047
    %v1056 = vsub.f32 %v1016, %v1048
    %v1057 = vsub.f32 %v1017, %v1049
    %v1058 = vsub.f32 %v1018, %v1050
    %v1059 = vsub.f32 %v1019, %v1051
    %v1060 = vsub.f32 %v1020, %v1052
    %v1061 = vsub.f32 %v1021, %v1053
    %v1062 = vmul.f32 %v1054, 1.442695
    %v1063 = vpow.pop %v1062
    %v1064 = vmul.f32 %v1055, 1.442695
    %v1065 = vpow.pop %v1064
    %v1066 = vmul.f32 %v1056, 1.442695
    %v1067 = vpow.pop %v1066
    %v1068 = vmul.f32 %v1057, 1.442695
    %v1069 = vpow.pop %v1068
    %v1070 = vmul.f32 %v1058, 1.442695
    %v1071 = vpow.pop %v1070
    %v1072 = vmul.f32 %v1059, 1.442695
    %v1073 = vpow.pop %v1072
    %v1074 = vmul.f32 %v1060, 1.442695
    %v1075 = vpow.pop %v1074
    %v1076 = vmul.f32 %v1061, 1.442695
    %v1077 = vpow.pop %v1076
    %v1078 = vsel %vm477, %v1063, 0.0
    %1079 = vadd.xlane.f32.xlu0 %v1078
    %v1080 = vpop.xlane.xlu0 %1079
    %v1081 = vsel %vm477, %v1065, 0.0
    %1082 = vadd.xlane.f32.xlu0 %v1081
    %v1083 = vpop.xlane.xlu0 %1082
    %v1084 = vsel %vm477, %v1067, 0.0
    %1085 = vadd.xlane.f32.xlu0 %v1084
    %v1086 = vpop.xlane.xlu0 %1085
    %v1087 = vsel %vm477, %v1069, 0.0
    %1088 = vadd.xlane.f32.xlu0 %v1087
    %v1089 = vpop.xlane.xlu0 %1088
    %v1090 = vsel %vm477, %v1071, 0.0
    %1091 = vadd.xlane.f32.xlu0 %v1090
    %v1092 = vpop.xlane.xlu0 %1091
    %v1093 = vsel %vm477, %v1073, 0.0
    %1094 = vadd.xlane.f32.xlu0 %v1093
    %v1095 = vpop.xlane.xlu0 %1094
    %v1096 = vsel %vm477, %v1075, 0.0
    %1097 = vadd.xlane.f32.xlu0 %v1096
    %v1098 = vpop.xlane.xlu0 %1097
    %v1099 = vsel %vm477, %v1077, 0.0
    %1100 = vadd.xlane.f32.xlu0 %v1099
    %v1101 = vpop.xlane.xlu0 %1100
    %vm1102 = vcmp.eq.f32.partialorder %v1080, 0.0
    %vm1103 = vcmp.eq.f32.partialorder %v1083, 0.0
    %vm1104 = vcmp.eq.f32.partialorder %v1086, 0.0
    %vm1105 = vcmp.eq.f32.partialorder %v1089, 0.0
    %vm1106 = vcmp.eq.f32.partialorder %v1092, 0.0
    %vm1107 = vcmp.eq.f32.partialorder %v1095, 0.0
    %vm1108 = vcmp.eq.f32.partialorder %v1098, 0.0
    %vm1109 = vcmp.eq.f32.partialorder %v1101, 0.0
    %v1110 = vsel %vm1102, 1.0, %v1080
    %v1111 = vsel %vm1103, 1.0, %v1083
    %v1112 = vsel %vm1104, 1.0, %v1086
    %v1113 = vsel %vm1105, 1.0, %v1089
    %v1114 = vsel %vm1106, 1.0, %v1092
    %v1115 = vsel %vm1107, 1.0, %v1095
    %v1116 = vsel %vm1108, 1.0, %v1098
    %v1117 = vsel %vm1109, 1.0, %v1101
    %v1118 = vrcp.pop %v1110
    %v1119 = vmul.f32 1.0, %v1118
    %v1120 = vrcp.pop %v1111
    %v1121 = vmul.f32 1.0, %v1120
    %v1122 = vrcp.pop %v1112
    %v1123 = vmul.f32 1.0, %v1122
    %v1124 = vrcp.pop %v1113
    %v1125 = vmul.f32 1.0, %v1124
    %v1126 = vrcp.pop %v1114
    %v1127 = vmul.f32 1.0, %v1126
    %v1128 = vrcp.pop %v1115
    %v1129 = vmul.f32 1.0, %v1128
    %v1130 = vrcp.pop %v1116
    %v1131 = vmul.f32 1.0, %v1130
    %v1132 = vrcp.pop %v1117
    %v1133 = vmul.f32 1.0, %v1132
    %v1134 = vmul.f32 %v1063, %v1119
    %v1135 = vmul.f32 %v1065, %v1121
    %v1136 = vmul.f32 %v1067, %v1123
    %v1137 = vmul.f32 %v1069, %v1125
    %v1138 = vmul.f32 %v1071, %v1127
    %v1139 = vmul.f32 %v1073, %v1129
    %v1140 = vmul.f32 %v1075, %v1131
    %v1141 = vmul.f32 %v1077, %v1133
    %v1143 = vsel %vm477, %v1134, 0
    %v1146 = vsel %vm477, %v1135, 0
    %v1149 = vsel %vm477, %v1136, 0
    %v1152 = vsel %vm477, %v1137, 0
    %v1155 = vsel %vm477, %v1138, 0
    %v1158 = vsel %vm477, %v1139, 0
    %v1161 = vsel %vm477, %v1140, 0
    %v1164 = vsel %vm477, %v1141, 0
    %1166 = vmatprep.subr.mxu0 0.0
    %1167 = vmatpush1.msra.mxu0 %v832
    %1168 = vmatprep.subr.mxu0 0.0
    %1169 = vmatpush1.msra.mxu0 %v837
    %1170 = vmatprep.subr.mxu0 0.0
    %1171 = vmatpush1.msra.mxu0 %v842
    %1172 = vmatprep.subr.mxu0 0.0
    %1173 = vmatpush1.msra.mxu0 %v847
    %1174 = vmatprep.subr.mxu0 0.0
    %1175 = vmatpush1.msra.mxu0 %v852
    %1176 = vmatprep.subr.mxu0 0.0
    %1177 = vmatpush1.msra.mxu0 %v857
    %1178 = vmatprep.subr.mxu0 0.0
    %1179 = vmatpush1.msra.mxu0 %v862
    %1180 = vmatprep.subr.mxu0 0.0
    %1181 = vmatpush1.msra.mxu0 %v867
    %1182 = vmatprep.subr.mxu0 0.0
    %1183 = vmatpush1.msra.mxu0 0.0
    %1184 = vmatprep.subr.mxu0 0.0
    %1185 = vmatpush1.msra.mxu0 0.0
    %1186 = vmatprep.subr.mxu0 0.0
    %1187 = vmatpush1.msra.mxu0 0.0
    %1188 = vmatprep.subr.mxu0 0.0
    %1189 = vmatpush1.msra.mxu0 0.0
    %1190 = vmatprep.subr.mxu0 0.0
    %1191 = vmatpush1.msra.mxu0 0.0
    %1192 = vmatprep.subr.mxu0 0.0
    %1193 = vmatpush1.msra.mxu0 0.0
    %1194 = vmatprep.subr.mxu0 0.0
    %1195 = vmatpush1.msra.mxu0 0.0
    %1196 = vmatprep.subr.mxu0 0.0
    %1197 = vmatpush1.msra.mxu0 0.0
    %1198 = vmatprep.subr.mxu0 0.0
    %1199 = vmatpush1.msra.mxu0 0.0
    %1200 = vmatprep.subr.mxu0 0.0
    %1201 = vmatpush1.msra.mxu0 0.0
    %1202 = vmatprep.subr.mxu0 0.0
    %1203 = vmatpush1.msra.mxu0 0.0
    %1204 = vmatprep.subr.mxu0 0.0
    %1205 = vmatpush1.msra.mxu0 0.0
    %1206 = vmatprep.subr.mxu0 0.0
    %1207 = vmatpush1.msra.mxu0 0.0
    %1208 = vmatprep.subr.mxu0 0.0
    %1209 = vmatpush1.msra.mxu0 0.0
    %1210 = vmatprep.subr.mxu0 0.0
    %1211 = vmatpush1.msra.mxu0 0.0
    %1212 = vmatprep.subr.mxu0 0.0
    %1213 = vmatpush1.msra.mxu0 0.0
    %1214 = vmatprep.subr.mxu0 0.0
    %1215 = vmatpush1.msra.mxu0 0.0
    %1216 = vmatprep.subr.mxu0 0.0
    %1217 = vmatpush1.msra.mxu0 0.0
    %1218 = vmatprep.subr.mxu0 0.0
    %1219 = vmatpush1.msra.mxu0 0.0
    %1220 = vmatprep.subr.mxu0 0.0
    %1221 = vmatpush1.msra.mxu0 0.0
    %1222 = vmatprep.subr.mxu0 0.0
    %1223 = vmatpush1.msra.mxu0 0.0
    %1224 = vmatprep.subr.mxu0 0.0
    %1225 = vmatpush1.msra.mxu0 0.0
    %1226 = vmatprep.subr.mxu0 0.0
    %1227 = vmatpush1.msra.mxu0 0.0
    %1228 = vmatprep.subr.mxu0 0.0
    %1229 = vmatpush1.msra.mxu0 0.0
    %1230 = vmatprep.mubr.f32.mxu0 0.0
    %1231 = vmatmul.mubr.f32.gmra.mrb[0].mxu0 %v1143
    %v1232 = vpop.f32.mrb[0].mxu0
    %v1233 = vadd.f32 0.0, %v1232
    %v1234 = vpop.f32.mrb[0].mxu0
    %1235 = vmatprep.mubr.f32.mxu0 0.0
    %1236 = vmatmul.mubr.f32.gmra.mrb[0].mxu0 %v1146
    %v1237 = vpop.f32.mrb[0].mxu0
    %v1238 = vadd.f32 0.0, %v1237
    %v1239 = vpop.f32.mrb[0].mxu0
    %1240 = vmatprep.mubr.f32.mxu0 0.0
    %1241 = vmatmul.mubr.f32.gmra.mrb[0].mxu0 %v1149
    %v1242 = vpop.f32.mrb[0].mxu0
    %v1243 = vadd.f32 0.0, %v1242
    %v1244 = vpop.f32.mrb[0].mxu0
    %1245 = vmatprep.mubr.f32.mxu0 0.0
    %1246 = vmatmul.mubr.f32.gmra.mrb[0].mxu0 %v1152
    %v1247 = vpop.f32.mrb[0].mxu0
    %v1248 = vadd.f32 0.0, %v1247
    %v1249 = vpop.f32.mrb[0].mxu0
    %1250 = vmatprep.mubr.f32.mxu0 0.0
    %1251 = vmatmul.mubr.f32.gmra.mrb[0].mxu0 %v1155
    %v1252 = vpop.f32.mrb[0].mxu0
    %v1253 = vadd.f32 0.0, %v1252
    %v1254 = vpop.f32.mrb[0].mxu0
    %1255 = vmatprep.mubr.f32.mxu0 0.0
    %1256 = vmatmul.mubr.f32.gmra.mrb[0].mxu0 %v1158
    %v1257 = vpop.f32.mrb[0].mxu0
    %v1258 = vadd.f32 0.0, %v1257
    %v1259 = vpop.f32.mrb[0].mxu0
    %1260 = vmatprep.mubr.f32.mxu0 0.0
    %1261 = vmatmul.mubr.f32.gmra.mrb[0].mxu0 %v1161
    %v1262 = vpop.f32.mrb[0].mxu0
    %v1263 = vadd.f32 0.0, %v1262
    %v1264 = vpop.f32.mrb[0].mxu0
    %1265 = vmatprep.mubr.f32.mxu0 0.0
    %1266 = vmatmul.mubr.f32.gmra.mrb[0].mxu0 %v1164
    %v1267 = vpop.f32.mrb[0].mxu0
    %v1268 = vadd.f32 0.0, %v1267
    %v1269 = vpop.f32.mrb[0].mxu0
    %1270 = vdwg.mxu0
    %v1271 = vmax.f32 %v1233, 0.0
    %v1272 = vmax.f32 %v1238, 0.0
    %v1273 = vmax.f32 %v1243, 0.0
    %v1274 = vmax.f32 %v1248, 0.0
    %v1275 = vmax.f32 %v1253, 0.0
    %v1276 = vmax.f32 %v1258, 0.0
    %v1277 = vmax.f32 %v1263, 0.0
    %v1278 = vmax.f32 %v1268, 0.0
    %v1279 = vld [vmem:[#allocation16] sm:$0xff]
    %v1280 = vld [vmem:[#allocation16 + $0x8] sm:$0xff]
    %v1281 = vld [vmem:[#allocation16 + $0x10] sm:$0xff]
    %v1282 = vld [vmem:[#allocation16 + $0x18] sm:$0xff]
    %v1283 = vld [vmem:[#allocation17] sm:$0x1]
    %v1285 = vlaneseq
    %v1286 = vshrl.u32 %v1285, 7
    %v1287 = vsub.s32 0, %v1286
    %v1288 = vrot.slane %v1283, %v1287
    %v1291 = vsel %vm195, %v1271, 0
    %v1294 = vsel %vm195, %v1272, 0
    %v1297 = vsel %vm195, %v1273, 0
    %v1300 = vsel %vm195, %v1274, 0
    %v1303 = vsel %vm195, %v1275, 0
    %v1306 = vsel %vm195, %v1276, 0
    %v1309 = vsel %vm195, %v1277, 0
    %v1312 = vsel %vm195, %v1278, 0
    %1314 = vmatprep.subr.mxu0 0.0
    %1315 = vmatpush1.msra.mxu0 %v1279
    %1316 = vmatprep.subr.mxu0 0.0
    %1317 = vmatpush1.msra.mxu0 %v1280
    %1318 = vmatprep.subr.mxu0 0.0
    %1319 = vmatpush1.msra.mxu0 %v1281
    %1320 = vmatprep.subr.mxu0 0.0
    %1321 = vmatpush1.msra.mxu0 %v1282
    %1322 = vmatprep.subr.mxu0 0.0
    %1323 = vmatpush1.msra.mxu0 0.0
    %1324 = vmatprep.subr.mxu0 0.0
    %1325 = vmatpush1.msra.mxu0 0.0
    %1326 = vmatprep.subr.mxu0 0.0
    %1327 = vmatpush1.msra.mxu0 0.0
    %1328 = vmatprep.subr.mxu0 0.0
    %1329 = vmatpush1.msra.mxu0 0.0
    %1330 = vmatprep.subr.mxu0 0.0
    %1331 = vmatpush1.msra.mxu0 0.0
    %1332 = vmatprep.subr.mxu0 0.0
    %1333 = vmatpush1.msra.mxu0 0.0
    %1334 = vmatprep.subr.mxu0 0.0
    %1335 = vmatpush1.msra.mxu0 0.0
    %1336 = vmatprep.subr.mxu0 0.0
    %1337 = vmatpush1.msra.mxu0 0.0
    %1338 = vmatprep.subr.mxu0 0.0
    %1339 = vmatpush1.msra.mxu0 0.0
    %1340 = vmatprep.subr.mxu0 0.0
    %1341 = vmatpush1.msra.mxu0 0.0
    %1342 = vmatprep.subr.mxu0 0.0
    %1343 = vmatpush1.msra.mxu0 0.0
    %1344 = vmatprep.subr.mxu0 0.0
    %1345 = vmatpush1.msra.mxu0 0.0
    %1346 = vmatprep.subr.mxu0 0.0
    %1347 = vmatpush1.msra.mxu0 0.0
    %1348 = vmatprep.subr.mxu0 0.0
    %1349 = vmatpush1.msra.mxu0 0.0
    %1350 = vmatprep.subr.mxu0 0.0
    %1351 = vmatpush1.msra.mxu0 0.0
    %1352 = vmatprep.subr.mxu0 0.0
    %1353 = vmatpush1.msra.mxu0 0.0
    %1354 = vmatprep.subr.mxu0 0.0
    %1355 = vmatpush1.msra.mxu0 0.0
    %1356 = vmatprep.subr.mxu0 0.0
    %1357 = vmatpush1.msra.mxu0 0.0
    %1358 = vmatprep.subr.mxu0 0.0
    %1359 = vmatpush1.msra.mxu0 0.0
    %1360 = vmatprep.subr.mxu0 0.0
    %1361 = vmatpush1.msra.mxu0 0.0
    %1362 = vmatprep.subr.mxu0 0.0
    %1363 = vmatpush1.msra.mxu0 0.0
    %1364 = vmatprep.subr.mxu0 0.0
    %1365 = vmatpush1.msra.mxu0 0.0
    %1366 = vmatprep.subr.mxu0 0.0
    %1367 = vmatpush1.msra.mxu0 0.0
    %1368 = vmatprep.subr.mxu0 0.0
    %1369 = vmatpush1.msra.mxu0 0.0
    %1370 = vmatprep.subr.mxu0 0.0
    %1371 = vmatpush1.msra.mxu0 0.0
    %1372 = vmatprep.subr.mxu0 0.0
    %1373 = vmatpush1.msra.mxu0 0.0
    %1374 = vmatprep.subr.mxu0 0.0
    %1375 = vmatpush1.msra.mxu0 0.0
    %1376 = vmatprep.subr.mxu0 0.0
    %1377 = vmatpush1.msra.mxu0 0.0
    %1378 = vmatprep.mubr.f32.mxu0 0.0
    %1379 = vmatmul.mubr.f32.gmra.mrb[0].mxu0 %v1291
    %v1380 = vpop.f32.mrb[0].mxu0
    %v1381 = vadd.f32 %v1288, %v1380
    %v1382 = vpop.f32.mrb[0].mxu0
    %1383 = vmatprep.mubr.f32.mxu0 0.0
    %1384 = vmatmul.mubr.f32.gmra.mrb[0].mxu0 %v1294
    %v1385 = vpop.f32.mrb[0].mxu0
    %v1386 = vadd.f32 %v1288, %v1385
    %v1387 = vpop.f32.mrb[0].mxu0
    %1388 = vmatprep.mubr.f32.mxu0 0.0
    %1389 = vmatmul.mubr.f32.gmra.mrb[0].mxu0 %v1297
    %v1390 = vpop.f32.mrb[0].mxu0
    %v1391 = vadd.f32 %v1288, %v1390
    %v1392 = vpop.f32.mrb[0].mxu0
    %1393 = vmatprep.mubr.f32.mxu0 0.0
    %1394 = vmatmul.mubr.f32.gmra.mrb[0].mxu0 %v1300
    %v1395 = vpop.f32.mrb[0].mxu0
    %v1396 = vadd.f32 %v1288, %v1395
    %v1397 = vpop.f32.mrb[0].mxu0
    %1398 = vmatprep.mubr.f32.mxu0 0.0
    %1399 = vmatmul.mubr.f32.gmra.mrb[0].mxu0 %v1303
    %v1400 = vpop.f32.mrb[0].mxu0
    %v1401 = vadd.f32 %v1288, %v1400
    %v1402 = vpop.f32.mrb[0].mxu0
    %1403 = vmatprep.mubr.f32.mxu0 0.0
    %1404 = vmatmul.mubr.f32.gmra.mrb[0].mxu0 %v1306
    %v1405 = vpop.f32.mrb[0].mxu0
    %v1406 = vadd.f32 %v1288, %v1405
    %v1407 = vpop.f32.mrb[0].mxu0
    %1408 = vmatprep.mubr.f32.mxu0 0.0
    %1409 = vmatmul.mubr.f32.gmra.mrb[0].mxu0 %v1309
    %v1410 = vpop.f32.mrb[0].mxu0
    %v1411 = vadd.f32 %v1288, %v1410
    %v1412 = vpop.f32.mrb[0].mxu0
    %1413 = vmatprep.mubr.f32.mxu0 0.0
    %1414 = vmatmul.mubr.f32.gmra.mrb[0].mxu0 %v1312
    %v1415 = vpop.f32.mrb[0].mxu0
    %v1416 = vadd.f32 %v1288, %v1415
    %v1417 = vpop.f32.mrb[0].mxu0
    %1418 = vdwg.mxu0
    %1419 = vmax.xlane.f32.xlu0 %v1381
    %v1420 = vpop.xlane.xlu0 %1419
    %1421 = vmax.xlane.f32.xlu0 %v1386
    %v1422 = vpop.xlane.xlu0 %1421
    %1423 = vmax.xlane.f32.xlu0 %v1391
    %v1424 = vpop.xlane.xlu0 %1423
    %1425 = vmax.xlane.f32.xlu0 %v1396
    %v1426 = vpop.xlane.xlu0 %1425
    %1427 = vmax.xlane.f32.xlu0 %v1401
    %v1428 = vpop.xlane.xlu0 %1427
    %1429 = vmax.xlane.f32.xlu0 %v1406
    %v1430 = vpop.xlane.xlu0 %1429
    %1431 = vmax.xlane.f32.xlu0 %v1411
    %v1432 = vpop.xlane.xlu0 %1431
    %1433 = vmax.xlane.f32.xlu0 %v1416
    %v1434 = vpop.xlane.xlu0 %1433
    %v1435 = vsub.f32 %v1381, %v1420
    %v1436 = vsub.f32 %v1386, %v1422
    %v1437 = vsub.f32 %v1391, %v1424
    %v1438 = vsub.f32 %v1396, %v1426
    %v1439 = vsub.f32 %v1401, %v1428
    %v1440 = vsub.f32 %v1406, %v1430
    %v1441 = vsub.f32 %v1411, %v1432
    %v1442 = vsub.f32 %v1416, %v1434
    %v1443 = vmul.f32 %v1435, 1.442695
    %v1444 = vpow.pop %v1443
    %v1445 = vmul.f32 %v1436, 1.442695
    %v1446 = vpow.pop %v1445
    %v1447 = vmul.f32 %v1437, 1.442695
    %v1448 = vpow.pop %v1447
    %v1449 = vmul.f32 %v1438, 1.442695
    %v1450 = vpow.pop %v1449
    %v1451 = vmul.f32 %v1439, 1.442695
    %v1452 = vpow.pop %v1451
    %v1453 = vmul.f32 %v1440, 1.442695
    %v1454 = vpow.pop %v1453
    %v1455 = vmul.f32 %v1441, 1.442695
    %v1456 = vpow.pop %v1455
    %v1457 = vmul.f32 %v1442, 1.442695
    %v1458 = vpow.pop %v1457
    %1459 = vadd.xlane.f32.xlu0 %v1444
    %v1460 = vpop.xlane.xlu0 %1459
    %1461 = vadd.xlane.f32.xlu0 %v1446
    %v1462 = vpop.xlane.xlu0 %1461
    %1463 = vadd.xlane.f32.xlu0 %v1448
    %v1464 = vpop.xlane.xlu0 %1463
    %1465 = vadd.xlane.f32.xlu0 %v1450
    %v1466 = vpop.xlane.xlu0 %1465
    %1467 = vadd.xlane.f32.xlu0 %v1452
    %v1468 = vpop.xlane.xlu0 %1467
    %1469 = vadd.xlane.f32.xlu0 %v1454
    %v1470 = vpop.xlane.xlu0 %1469
    %1471 = vadd.xlane.f32.xlu0 %v1456
    %v1472 = vpop.xlane.xlu0 %1471
    %1473 = vadd.xlane.f32.xlu0 %v1458
    %v1474 = vpop.xlane.xlu0 %1473
    %v1475 = vlog2.pop %v1460
    %v1476 = vmul.f32 %v1475, 0.6931472
    %v1477 = vlog2.pop %v1462
    %v1478 = vmul.f32 %v1477, 0.6931472
    %v1479 = vlog2.pop %v1464
    %v1480 = vmul.f32 %v1479, 0.6931472
    %v1481 = vlog2.pop %v1466
    %v1482 = vmul.f32 %v1481, 0.6931472
    %v1483 = vlog2.pop %v1468
    %v1484 = vmul.f32 %v1483, 0.6931472
    %v1485 = vlog2.pop %v1470
    %v1486 = vmul.f32 %v1485, 0.6931472
    %v1487 = vlog2.pop %v1472
    %v1488 = vmul.f32 %v1487, 0.6931472
    %v1489 = vlog2.pop %v1474
    %v1490 = vmul.f32 %v1489, 0.6931472
    %v1491 = vadd.f32 %v1476, %v1420
    %v1492 = vadd.f32 %v1478, %v1422
    %v1493 = vadd.f32 %v1480, %v1424
    %v1494 = vadd.f32 %v1482, %v1426
    %v1495 = vadd.f32 %v1484, %v1428
    %v1496 = vadd.f32 %v1486, %v1430
    %v1497 = vadd.f32 %v1488, %v1432
    %v1498 = vadd.f32 %v1490, %v1434
    %v1499 = vsub.f32 %v1381, %v1491
    %v1500 = vsub.f32 %v1386, %v1492
    %v1501 = vsub.f32 %v1391, %v1493
    %v1502 = vsub.f32 %v1396, %v1494
    %v1503 = vsub.f32 %v1401, %v1495
    %v1504 = vsub.f32 %v1406, %v1496
    %v1505 = vsub.f32 %v1411, %v1497
    %v1506 = vsub.f32 %v1416, %v1498
    %1507 = vst [vmem:[#allocation19] sm:$0xff] %v1499
    %1508 = vst [vmem:[#allocation19 + $0x8] sm:$0xff] %v1500
    %1509 = vst [vmem:[#allocation19 + $0x10] sm:$0xff] %v1501
    %1510 = vst [vmem:[#allocation19 + $0x18] sm:$0xff] %v1502
    %1511 = vst [vmem:[#allocation19 + $0x20] sm:$0xff] %v1503
    %1512 = vst [vmem:[#allocation19 + $0x28] sm:$0xff] %v1504
    %1513 = vst [vmem:[#allocation19 + $0x30] sm:$0xff] %v1505
    %1514 = vst [vmem:[#allocation19 + $0x38] sm:$0xff] %v1506
    %1515 = vst.msk [vmem:[#allocation20] sm:$0xff] %vm477, %v1134
    %1516 = vst.msk [vmem:[#allocation20 + $0x8] sm:$0xff] %vm477, %v1135
    %1517 = vst.msk [vmem:[#allocation20 + $0x10] sm:$0xff] %vm477, %v1136
    %1518 = vst.msk [vmem:[#allocation20 + $0x18] sm:$0xff] %vm477, %v1137
    %1519 = vst.msk [vmem:[#allocation20 + $0x20] sm:$0xff] %vm477, %v1138
    %1520 = vst.msk [vmem:[#allocation20 + $0x28] sm:$0xff] %vm477, %v1139
    %1521 = vst.msk [vmem:[#allocation20 + $0x30] sm:$0xff] %vm477, %v1140
    %1522 = vst.msk [vmem:[#allocation20 + $0x38] sm:$0xff] %vm477, %v1141
    // Predicated region
    $region82: #{tpu_custom_call.1} parent=1 // pred_check
      _
    $region83: #{tpu_custom_call.1} parent=1 // pred_check_branch
      %1524 = sbr.rel (0) target = $region85
    $region84: #{tpu_custom_call.1} parent=1 // pred_region
      %s1526 = ssub.s32 1024, 1024
      %1527 = vsyncadd [#allocation4], %s1526
      %s1528 = sshll.u32 [#allocation19], 4
      %s1529 = int_to_ptr.vmem [resolvable:$true] %s1528
      %1534 = dma.vmem_to_hbm [thread:$0]  %s1529, 1024, %s10, [#allocation4], 128, 128, 8
    $region85: #{tpu_custom_call.1} parent=1 // pred_fallthru
      _
    // Predicated region
    $region86: #{tpu_custom_call.1} parent=1 // pred_check
      _
    $region87: #{tpu_custom_call.1} parent=1 // pred_check_branch
      %1536 = sbr.rel (0) target = $region89
    $region88: #{tpu_custom_call.1} parent=1 // pred_region
      %s1538 = ssub.s32 1024, 1024
      %1539 = vsyncadd [#allocation21], %s1538
      %s1540 = sshll.u32 [#allocation20], 4
      %s1541 = int_to_ptr.vmem [resolvable:$true] %s1540
      %1546 = dma.vmem_to_hbm [thread:$0]  %s1541, 1024, %s11, [#allocation21], 128, 128, 8
    $region89: #{tpu_custom_call.1} parent=1 // pred_fallthru
      _
    // Predicated region
    $region90: #{tpu_custom_call.1} parent=1 // pred_check
      _
    $region91: #{tpu_custom_call.1} parent=1 // pred_check_branch
      %1548 = sbr.rel (0) target = $region93
    $region92: #{tpu_custom_call.1} parent=1 // pred_region
      %1549 = dma.done [#allocation4], 1024
    $region93: #{tpu_custom_call.1} parent=1 // pred_fallthru
      _
    // Predicated region
    $region94: #{tpu_custom_call.1} parent=1 // pred_check
      _
    $region95: #{tpu_custom_call.1} parent=1 // pred_check_branch
      %1551 = sbr.rel (0) target = $region97
    $region96: #{tpu_custom_call.1} parent=1 // pred_region
      %1552 = dma.done [#allocation21], 1024
    $region97: #{tpu_custom_call.1} parent=1 // pred_fallthru
      _
    %1553 = vsyncpa [#allocation3], 1
    %1554 = vsyncpa [#allocation6], 1
    %1555 = vsyncpa [#allocation9], 1
    %1556 = vsyncpa [#allocation12], 1
    %1557 = vsyncpa [#allocation15], 1
    %1558 = vsyncpa [#allocation18], 1
    %1559 = vsyncpa [#allocation4], 1
    %1560 = vsyncpa [#allocation21], 1

</llo_original>
